<compile_context>
chip_gen: v6e
topology: v6e:2x2x1
jax: 0.10.0
libtpu: 0.0.40
codegen_flags: <defaults>
</compile_context>

<pallas_src>
import functools

import jax
import jax.numpy as jnp
from jax import lax
from jax.experimental import pallas as pl
from jax.experimental.pallas import tpu as pltpu


# ------------------------------ Fused kernel --------------------------------

def _fused_ir_kernel(*refs, H, W, Hout, Wout, stride, hidden, expand, use_res,
                     lpad, wpad, mm_dtype):
    """Fused InvertedResidual block for ONE batch element.

    refs (in order): x, [w_exp, b_exp,] w_dw, b_dw, w_proj, b_proj, o, hid
      x     : (1, H*W, Cin)        spatial flattened, channels on lanes
      w_exp : (Cin, hidden)        1x1 expand weight, BN scale folded in
      w_dw  : (9, hidden)          3x3 depthwise weight (tap-major), BN folded
      w_proj: (hidden, Cout)       1x1 projection weight, BN scale folded in
      b_*   : (1, C)               folded BatchNorm biases
      o     : (1, Hout*Wout, Cout)
      hid   : (H+2, wpad, hidden)  VMEM halo buffer; data at cols [lpad, lpad+W)
    """
    if expand:
        (x_ref, w_exp_ref, b_exp_ref,
         w_dw_ref, b_dw_ref,
         w_proj_ref, b_proj_ref,
         o_ref, hid_ref) = refs
    else:
        (x_ref,
         w_dw_ref, b_dw_ref,
         w_proj_ref, b_proj_ref,
         o_ref, hid_ref) = refs

    f32 = jnp.float32
    rpad = wpad - lpad - W

    # ---- Per-step halo clear (aligned stores only; interior is overwritten).
    hid_ref[0, :, :] = jnp.zeros((wpad, hidden), f32)
    hid_ref[H + 1, :, :] = jnp.zeros((wpad, hidden), f32)
    hid_ref[pl.ds(1, H), pl.ds(0, lpad), :] = jnp.zeros((H, lpad, hidden), f32)
    hid_ref[pl.ds(1, H), pl.ds(lpad + W, rpad), :] = (
        jnp.zeros((H, rpad, hidden), f32))

    # ---- Stage 1: 1x1 expand conv (BN folded) + ReLU6 -> hid scratch. ------
    # Row slabs bound the live matmul output; stores land at sublane offset
    # `lpad` (multiple of 8), i.e. unmasked.
    if expand:
        w_exp = w_exp_ref[...]
        b_exp = b_exp_ref[...]
    EXP_SB = min(H, 32)
    for r0 in range(0, H, EXP_SB):
        rb = min(EXP_SB, H - r0)
        x_slab = x_ref[0, pl.ds(r0 * W, rb * W), :]
        if expand:
            h = jnp.dot(x_slab.astype(mm_dtype), w_exp,
                        preferred_element_type=f32)
            h = jnp.clip(h + b_exp, 0.0, 6.0)
        else:
            h = x_slab.astype(f32)
        hid_ref[pl.ds(1 + r0, rb), pl.ds(lpad, W), :] = h.reshape(rb, W, hidden)

    # ---- Stage 2+3: depthwise 3x3 (BN folded) + ReLU6, fused projection. ---
    # Taps stay (1,1,hidden): no (Wout, hidden) broadcast materialization.
    w_dw = w_dw_ref[...]                                   # (9, hidden)
    w_taps = [w_dw[t:t + 1, :].reshape(1, 1, hidden) for t in range(9)]
    b_dw = b_dw_ref[...].reshape(1, 1, hidden)
    w_proj = w_proj_ref[...]                               # (hidden, Cout)
    b_proj = b_proj_ref[...]                               # (1, Cout)

    def emit_rows(i0, nr):
        """Depthwise + ReLU6 + projection (+ residual) for output rows
        [i0, i0 + nr); results go straight to o_ref (no dw scratch)."""
        r0 = i0 if stride == 1 else i0 * stride
        acc = None
        for t in range(9):
            dy, dx = divmod(t, 3)
            if stride == 1:
                tap = hid_ref[pl.ds(r0 + dy, nr),
                              pl.ds(lpad - 1 + dx, Wout), :]
            else:
                tap = hid_ref[pl.ds(r0 + dy, nr),
                              pl.ds(lpad - 1 + dx, Wout, stride), :]
            contrib = tap * w_taps[t]
            acc = contrib if acc is None else acc + contrib
        y = jnp.clip(acc + b_dw, 0.0, 6.0).reshape(nr * Wout, hidden)
        o = jnp.dot(y.astype(mm_dtype), w_proj, preferred_element_type=f32)
        o = o + b_proj
        if use_res:
            o = o + x_ref[0, pl.ds(i0 * W, nr * W), :].astype(f32)
        o_ref[0, pl.ds(i0 * Wout, nr * Wout), :] = o.astype(o_ref.dtype)

    if stride == 1:
        SB = min(8, Hout)          # 8-row slabs: M >= 8*Wout for the MXU
    else:
        SB = 1                     # per-row; see stride=2 TODO above
    n_full = Hout // SB
    rem = Hout - n_full * SB

    if n_full == 1:
        emit_rows(0, SB)
    elif n_full > 1:
        def slab_body(s, carry):
            emit_rows(pl.multiple_of(s * SB, SB), SB)
            return carry
        lax.fori_loop(0, n_full, slab_body, 0, unroll=min(n_full, 4))
    if rem > 0:
        emit_rows(n_full * SB, rem)


# ------------------------------ Host wrapper --------------------------------

def _vmem_limit_bytes():
    # v5e/v6e: 128 MiB physical VMEM -> allow large resident blocks.
    # v7x: 64 MiB physical -> keep headroom under ~48 MiB.
    try:
        kind = jax.devices()[0].device_kind.lower()
    except Exception:
        kind = ""
    if "v7" in kind:
        return 48 * 1024 * 1024
    return 100 * 1024 * 1024


def inverted_residual_forward(x_nchw, params, *, inp, out, stride, expand_ratio,
                              matmul_dtype=jnp.float32):
    """NCHW in / NCHW out, matching the PyTorch module (BN in eval mode).

    matmul_dtype: operand dtype for the two MXU matmuls only (use jnp.bfloat16
    on v6e/v7x); all elementwise math stays f32.
    """
    hidden = int(round(inp * expand_ratio))
    expand = expand_ratio != 1
    use_res = (stride == 1 and inp == out)

    N, _, H, W = x_nchw.shape
    Hout = (H - 1) // stride + 1
    Wout = (W - 1) // stride + 1

    lpad = 8                # left halo block: data stores are sublane-aligned
    wpad = W + 16           # [0..7]=0 | [8..8+W-1]=data | [8+W..]=0

    # NCHW -> NHWC -> (N, H*W, C): channels on the lane axis; 1x1 convs become
    # plain 2-D matmuls inside the kernel.
    x = jnp.transpose(x_nchw, (0, 2, 3, 1)).reshape(N, H * W, inp)

    f32 = jnp.float32
    # Fold BN scales into the conv weights (per output channel); only the
    # biases are passed to the kernel.
    w_dw_f = jnp.asarray(params["w_dw"], f32) * jnp.asarray(params["s_dw"], f32)[None, :]
    w_proj_f = (jnp.asarray(params["w_proj"], f32)
                * jnp.asarray(params["s_proj"], f32)[None, :]).astype(matmul_dtype)
    b_dw = jnp.asarray(params["b_dw"], f32).reshape(1, hidden)
    b_proj = jnp.asarray(params["b_proj"], f32).reshape(1, out)

    args = [x]
    in_specs = [pl.BlockSpec((1, H * W, inp), lambda n: (n, 0, 0))]

    def add_full(a):                 # whole (small) 2-D array, constant index
        args.append(a)
        in_specs.append(pl.BlockSpec(a.shape, lambda n: (0, 0)))

    if expand:
        w_exp_f = (jnp.asarray(params["w_exp"], f32)
                   * jnp.asarray(params["s_exp"], f32)[None, :]).astype(matmul_dtype)
        b_exp = jnp.asarray(params["b_exp"], f32).reshape(1, hidden)
        add_full(w_exp_f)
        add_full(b_exp)
    add_full(w_dw_f)
    add_full(b_dw)
    add_full(w_proj_f)
    add_full(b_proj)

    kernel = functools.partial(
        _fused_ir_kernel, H=H, W=W, Hout=Hout, Wout=Wout, stride=stride,
        hidden=hidden, expand=expand, use_res=use_res,
        lpad=lpad, wpad=wpad, mm_dtype=matmul_dtype)

    y = pl.pallas_call(
        kernel,
        out_shape=jax.ShapeDtypeStruct((N, Hout * Wout, out), x.dtype),
        grid=(N,),
        in_specs=in_specs,
        out_specs=pl.BlockSpec((1, Hout * Wout, out), lambda n: (n, 0, 0)),
        scratch_shapes=[
            pltpu.VMEM((H + 2, wpad, hidden), jnp.float32),  # halo'd hidden
        ],
        compiler_params=pltpu.CompilerParams(
            dimension_semantics=("parallel",),       # shard batch over TCs
            vmem_limit_bytes=_vmem_limit_bytes(),
        ),
    )(*args)

    y = y.reshape(N, Hout, Wout, out)
    return jnp.transpose(y, (0, 3, 1, 2))            # NHWC -> NCHW


# ----------------------------- Module emulation -----------------------------

def init_params(key, inp, out, expand_ratio, eps=1e-5):
    """Deterministic synthetic params; BN kept as (scale, bias) pairs."""
    hidden = int(round(inp * expand_ratio))
    ks = jax.random.split(key, 16)

    def bn(kg, kb, km, kv, c):
        gamma = 1.0 + 0.1 * jax.random.normal(kg, (c,), jnp.float32)
        beta = 0.1 * jax.random.normal(kb, (c,), jnp.float32)
        mean = 0.1 * jax.random.normal(km, (c,), jnp.float32)
        var = jnp.abs(jax.random.normal(kv, (c,), jnp.float32)) + 0.5
        scale = gamma / jnp.sqrt(var + eps)
        bias = beta - mean * scale
        return scale, bias

    p = {}
    if expand_ratio != 1:
        # PyTorch 1x1 conv weight (hidden, inp, 1, 1) stored here as (inp, hidden)
        p["w_exp"] = 0.2 * jax.random.normal(ks[0], (inp, hidden), jnp.float32)
        p["s_exp"], p["b_exp"] = bn(ks[1], ks[2], ks[3], ks[4], hidden)
    # depthwise weight (hidden, 1, 3, 3) stored as (9, hidden) tap-major
    p["w_dw"] = 0.2 * jax.random.normal(ks[5], (9, hidden), jnp.float32)
    p["s_dw"], p["b_dw"] = bn(ks[6], ks[7], ks[8], ks[9], hidden)
    # projection 1x1 conv weight (out, hidden, 1, 1) stored as (hidden, out)
    p["w_proj"] = 0.2 * jax.random.normal(ks[10], (hidden, out), jnp.float32)
    p["s_proj"], p["b_proj"] = bn(ks[11], ks[12], ks[13], ks[14], out)
    return p


# Pure-JAX reference (NCHW, lax convs) for correctness check.
def ref_forward(x, p, *, inp, out, stride, expand_ratio):
    hidden = int(round(inp * expand_ratio))
    use_res = (stride == 1 and inp == out)
    h = x
    if expand_ratio != 1:
        w = jnp.transpose(p["w_exp"])[..., None, None]  # (hidden, inp, 1, 1)
        h = lax.conv_general_dilated(h, w, (1, 1), "VALID")
        h = h * p["s_exp"][None, :, None, None] + p["b_exp"][None, :, None, None]
        h = jnp.clip(h, 0.0, 6.0)
    wd = jnp.transpose(p["w_dw"].reshape(3, 3, hidden), (2, 0, 1))[:, None, :, :]
    h = lax.conv_general_dilated(h, wd, (stride, stride), ((1, 1), (1, 1)),
                                 feature_group_count=hidden)
    h = h * p["s_dw"][None, :, None, None] + p["b_dw"][None, :, None, None]
    h = jnp.clip(h, 0.0, 6.0)
    wp = jnp.transpose(p["w_proj"])[..., None, None]  # (out, hidden, 1, 1)
    y = lax.conv_general_dilated(h, wp, (1, 1), "VALID")
    y = y * p["s_proj"][None, :, None, None] + p["b_proj"][None, :, None, None]
    return x + y if use_res else y


if __name__ == "__main__":
    key = jax.random.PRNGKey(0)
    kx, kp, kx2, kp2, kx3, kp3 = jax.random.split(key, 6)
    N, H, W = 2, 16, 16

    def run_and_check(x, p, cfg, *, matmul_dtype=jnp.float32, atol=1e-4, rtol=1e-4):
        y = inverted_residual_forward(x, p, matmul_dtype=matmul_dtype, **cfg)
        y = jax.block_until_ready(y)
        y_ref = ref_forward(x, p, **cfg)
        Hout = (H - 1) // cfg["stride"] + 1
        Wout = (W - 1) // cfg["stride"] + 1
        assert y.shape == (x.shape[0], cfg["out"], Hout, Wout), y.shape
        assert jnp.allclose(y, y_ref, atol=atol, rtol=rtol), (
            float(jnp.max(jnp.abs(y - y_ref))))
        return y

    # Config A: expand_ratio != 1, stride 1, inp == out -> residual path.
    cfg_a = dict(inp=4, out=4, stride=1, expand_ratio=4)        # hidden = 16
    x_a = jax.random.normal(kx, (N, cfg_a["inp"], H, W), jnp.float32)
    p_a = init_params(kp, cfg_a["inp"], cfg_a["out"], cfg_a["expand_ratio"])
    run_and_check(x_a, p_a, cfg_a)

    # Config B: expand_ratio == 1, inp != out -> no expand conv, no residual.
    cfg_b = dict(inp=8, out=16, stride=1, expand_ratio=1)
    x_b = jax.random.normal(kx2, (N, cfg_b["inp"], H, W), jnp.float32)
    p_b = init_params(kp2, cfg_b["inp"], cfg_b["out"], cfg_b["expand_ratio"])
    run_and_check(x_b, p_b, cfg_b)

    # Config C: stride 2 downsampling path (previously untested).
    cfg_c = dict(inp=4, out=8, stride=2, expand_ratio=4)        # hidden = 16
    x_c = jax.random.normal(kx3, (N, cfg_c["inp"], H, W), jnp.float32)
    p_c = init_params(kp3, cfg_c["inp"], cfg_c["out"], cfg_c["expand_ratio"])
    run_and_check(x_c, p_c, cfg_c)

    # Config D: bf16 MXU operands (v6e/v7x recommendation); loose tolerance.
    run_and_check(x_a, p_a, cfg_a, matmul_dtype=jnp.bfloat16,
                  atol=1e-1, rtol=1e-1)

    print("KERNEL_OK")
</pallas_src>

<mosaic_0001>
module attributes {stable_mosaic.version = 11 : i64} {
  func.func @_fused_ir_kernel(%arg0: i32, %arg1: memref<1x256x4xf32, #tpu.memory_space<vmem>>, %arg2: memref<4x16xf32, #tpu.memory_space<vmem>>, %arg3: memref<1x16xf32, #tpu.memory_space<vmem>>, %arg4: memref<9x16xf32, #tpu.memory_space<vmem>>, %arg5: memref<1x16xf32, #tpu.memory_space<vmem>>, %arg6: memref<16x4xf32, #tpu.memory_space<vmem>>, %arg7: memref<1x4xf32, #tpu.memory_space<vmem>>, %arg8: memref<1x256x4xf32, #tpu.memory_space<vmem>>, %arg9: memref<18x32x16xf32, #tpu.memory_space<vmem>>) attributes {dimension_semantics = [#tpu.dimension_semantics<parallel>], iteration_bounds = array<i64: 2>, scalar_prefetch = 0 : i64, scratch_operands = 1 : i64, tpu.core_type = #tpu.core_type<tc>, window_params = [{transform_indices = @transform_0, window_bounds = array<i64: 1, 256, 4>}, {pipeline_mode = #tpu.pipeline_mode<synchronous>, transform_indices = @transform_1, window_bounds = array<i64: 4, 16>}, {pipeline_mode = #tpu.pipeline_mode<synchronous>, transform_indices = @transform_2, window_bounds = array<i64: 1, 16>}, {pipeline_mode = #tpu.pipeline_mode<synchronous>, transform_indices = @transform_3, window_bounds = array<i64: 9, 16>}, {pipeline_mode = #tpu.pipeline_mode<synchronous>, transform_indices = @transform_4, window_bounds = array<i64: 1, 16>}, {pipeline_mode = #tpu.pipeline_mode<synchronous>, transform_indices = @transform_5, window_bounds = array<i64: 16, 4>}, {pipeline_mode = #tpu.pipeline_mode<synchronous>, transform_indices = @transform_6, window_bounds = array<i64: 1, 4>}, {transform_indices = @transform_7, window_bounds = array<i64: 1, 256, 4>}]} {
    %cst = arith.constant 0.000000e+00 : f32
    %0 = vector.broadcast %cst : f32 to vector<32x16xf32>
    %c0 = arith.constant 0 : index
    %c0_0 = arith.constant 0 : index
    %c0_1 = arith.constant 0 : index
    %1 = vector.load %arg9[%c0, %c0_0, %c0_1] : memref<18x32x16xf32, #tpu.memory_space<vmem>>, vector<1x32x16xf32>
    %2 = vector.shape_cast %1 : vector<1x32x16xf32> to vector<32x16xf32>
    %3 = vector.shape_cast %0 : vector<32x16xf32> to vector<1x32x16xf32>
    tpu.vector_store %arg9[%c0, %c0_0, %c0_1], %3 {strides = array<i32>} : memref<18x32x16xf32, #tpu.memory_space<vmem>>, vector<1x32x16xf32>,
    %cst_2 = arith.constant 0.000000e+00 : f32
    %4 = vector.broadcast %cst_2 : f32 to vector<32x16xf32>
    %c17 = arith.constant 17 : index
    %c0_3 = arith.constant 0 : index
    %c0_4 = arith.constant 0 : index
    %5 = vector.load %arg9[%c17, %c0_3, %c0_4] : memref<18x32x16xf32, #tpu.memory_space<vmem>>, vector<1x32x16xf32>
    %6 = vector.shape_cast %5 : vector<1x32x16xf32> to vector<32x16xf32>
    %7 = vector.shape_cast %4 : vector<32x16xf32> to vector<1x32x16xf32>
    tpu.vector_store %arg9[%c17, %c0_3, %c0_4], %7 {strides = array<i32>} : memref<18x32x16xf32, #tpu.memory_space<vmem>>, vector<1x32x16xf32>,
    %cst_5 = arith.constant 0.000000e+00 : f32
    %8 = vector.broadcast %cst_5 : f32 to vector<16x8x16xf32>
    %c1 = arith.constant 1 : index
    %c0_6 = arith.constant 0 : index
    %c0_7 = arith.constant 0 : index
    %9 = vector.load %arg9[%c1, %c0_6, %c0_7] : memref<18x32x16xf32, #tpu.memory_space<vmem>>, vector<16x8x16xf32>
    tpu.vector_store %arg9[%c1, %c0_6, %c0_7], %8 {strides = array<i32>} : memref<18x32x16xf32, #tpu.memory_space<vmem>>, vector<16x8x16xf32>,
    %cst_8 = arith.constant 0.000000e+00 : f32
    %10 = vector.broadcast %cst_8 : f32 to vector<16x8x16xf32>
    %c1_9 = arith.constant 1 : index
    %c24 = arith.constant 24 : index
    %c0_10 = arith.constant 0 : index
    %11 = vector.load %arg9[%c1_9, %c24, %c0_10] : memref<18x32x16xf32, #tpu.memory_space<vmem>>, vector<16x8x16xf32>
    tpu.vector_store %arg9[%c1_9, %c24, %c0_10], %10 {strides = array<i32>} : memref<18x32x16xf32, #tpu.memory_space<vmem>>, vector<16x8x16xf32>,
    %c0_11 = arith.constant 0 : index
    %c0_12 = arith.constant 0 : index
    %12 = vector.load %arg2[%c0_11, %c0_12] : memref<4x16xf32, #tpu.memory_space<vmem>>, vector<4x16xf32>
    %c0_13 = arith.constant 0 : index
    %c0_14 = arith.constant 0 : index
    %13 = vector.load %arg3[%c0_13, %c0_14] : memref<1x16xf32, #tpu.memory_space<vmem>>, vector<1x16xf32>
    %c0_15 = arith.constant 0 : index
    %c0_16 = arith.constant 0 : index
    %c0_17 = arith.constant 0 : index
    %14 = vector.load %arg1[%c0_15, %c0_16, %c0_17] : memref<1x256x4xf32, #tpu.memory_space<vmem>>, vector<1x256x4xf32>
    %15 = vector.shape_cast %14 : vector<1x256x4xf32> to vector<256x4xf32>
    %cst_18 = arith.constant dense<0.000000e+00> : vector<256x16xf32>
    %16 = tpu.matmul %15, %12, %cst_18 {dimension_numbers = #tpu.dot_dimension_numbers<[1], [0], [0], [1], [0, 0, 1, 1], [], []>} : vector<256x4xf32>, vector<4x16xf32>, vector<256x16xf32> -> vector<256x16xf32>
    %17 = vector.broadcast %13 : vector<1x16xf32> to vector<256x16xf32>
    %18 = arith.addf %16, %17 : vector<256x16xf32>
    %cst_19 = arith.constant 0.000000e+00 : f32
    %cst_20 = arith.constant 6.000000e+00 : f32
    %19 = vector.broadcast %cst_19 : f32 to vector<256x16xf32>
    %20 = arith.maximumf %19, %18 : vector<256x16xf32>
    %21 = vector.broadcast %cst_20 : f32 to vector<256x16xf32>
    %22 = arith.minimumf %21, %20 : vector<256x16xf32>
    %23 = vector.shape_cast %22 : vector<256x16xf32> to vector<16x16x16xf32>
    %c1_21 = arith.constant 1 : index
    %c8 = arith.constant 8 : index
    %c0_22 = arith.constant 0 : index
    %24 = vector.load %arg9[%c1_21, %c8, %c0_22] : memref<18x32x16xf32, #tpu.memory_space<vmem>>, vector<16x16x16xf32>
    tpu.vector_store %arg9[%c1_21, %c8, %c0_22], %23 {strides = array<i32>} : memref<18x32x16xf32, #tpu.memory_space<vmem>>, vector<16x16x16xf32>,
    %c0_23 = arith.constant 0 : index
    %c0_24 = arith.constant 0 : index
    %25 = vector.load %arg4[%c0_23, %c0_24] : memref<9x16xf32, #tpu.memory_space<vmem>>, vector<9x16xf32>
    %26 = vector.extract_strided_slice %25 {offsets = [0, 0], sizes = [1, 16], strides = [1, 1]} : vector<9x16xf32> to vector<1x16xf32>
    %27 = vector.shape_cast %26 : vector<1x16xf32> to vector<1x1x16xf32>
    %28 = vector.extract_strided_slice %25 {offsets = [1, 0], sizes = [1, 16], strides = [1, 1]} : vector<9x16xf32> to vector<1x16xf32>
    %29 = vector.shape_cast %28 : vector<1x16xf32> to vector<1x1x16xf32>
    %30 = vector.extract_strided_slice %25 {offsets = [2, 0], sizes = [1, 16], strides = [1, 1]} : vector<9x16xf32> to vector<1x16xf32>
    %31 = vector.shape_cast %30 : vector<1x16xf32> to vector<1x1x16xf32>
    %32 = vector.extract_strided_slice %25 {offsets = [3, 0], sizes = [1, 16], strides = [1, 1]} : vector<9x16xf32> to vector<1x16xf32>
    %33 = vector.shape_cast %32 : vector<1x16xf32> to vector<1x1x16xf32>
    %34 = vector.extract_strided_slice %25 {offsets = [4, 0], sizes = [1, 16], strides = [1, 1]} : vector<9x16xf32> to vector<1x16xf32>
    %35 = vector.shape_cast %34 : vector<1x16xf32> to vector<1x1x16xf32>
    %36 = vector.extract_strided_slice %25 {offsets = [5, 0], sizes = [1, 16], strides = [1, 1]} : vector<9x16xf32> to vector<1x16xf32>
    %37 = vector.shape_cast %36 : vector<1x16xf32> to vector<1x1x16xf32>
    %38 = vector.extract_strided_slice %25 {offsets = [6, 0], sizes = [1, 16], strides = [1, 1]} : vector<9x16xf32> to vector<1x16xf32>
    %39 = vector.shape_cast %38 : vector<1x16xf32> to vector<1x1x16xf32>
    %40 = vector.extract_strided_slice %25 {offsets = [7, 0], sizes = [1, 16], strides = [1, 1]} : vector<9x16xf32> to vector<1x16xf32>
    %41 = vector.shape_cast %40 : vector<1x16xf32> to vector<1x1x16xf32>
    %42 = vector.extract_strided_slice %25 {offsets = [8, 0], sizes = [1, 16], strides = [1, 1]} : vector<9x16xf32> to vector<1x16xf32>
    %43 = vector.shape_cast %42 : vector<1x16xf32> to vector<1x1x16xf32>
    %c0_25 = arith.constant 0 : index
    %c0_26 = arith.constant 0 : index
    %44 = vector.load %arg5[%c0_25, %c0_26] : memref<1x16xf32, #tpu.memory_space<vmem>>, vector<1x16xf32>
    %45 = vector.shape_cast %44 : vector<1x16xf32> to vector<1x1x16xf32>
    %c0_27 = arith.constant 0 : index
    %c0_28 = arith.constant 0 : index
    %46 = vector.load %arg6[%c0_27, %c0_28] : memref<16x4xf32, #tpu.memory_space<vmem>>, vector<16x4xf32>
    %c0_29 = arith.constant 0 : index
    %c0_30 = arith.constant 0 : index
    %47 = vector.load %arg7[%c0_29, %c0_30] : memref<1x4xf32, #tpu.memory_space<vmem>>, vector<1x4xf32>
    %c0_i32 = arith.constant 0 : i32
    %c8_i32 = arith.constant 8 : i32
    %48 = arith.muli %c0_i32, %c8_i32 : i32
    %49 = tpu.assume_multiple %48, 8 : i32
    %c0_i32_31 = arith.constant 0 : i32
    %50 = arith.addi %49, %c0_i32_31 : i32
    %51 = arith.index_cast %50 : i32 to index
    %c7 = arith.constant 7 : index
    %c0_32 = arith.constant 0 : index
    %52 = vector.load %arg9[%51, %c7, %c0_32] : memref<18x32x16xf32, #tpu.memory_space<vmem>>, vector<8x16x16xf32>
    %53 = vector.broadcast %27 : vector<1x1x16xf32> to vector<8x16x16xf32>
    %54 = arith.mulf %52, %53 : vector<8x16x16xf32>
    %c0_i32_33 = arith.constant 0 : i32
    %55 = arith.addi %49, %c0_i32_33 : i32
    %56 = arith.index_cast %55 : i32 to index
    %c8_34 = arith.constant 8 : index
    %c0_35 = arith.constant 0 : index
    %57 = vector.load %arg9[%56, %c8_34, %c0_35] : memref<18x32x16xf32, #tpu.memory_space<vmem>>, vector<8x16x16xf32>
    %58 = vector.broadcast %29 : vector<1x1x16xf32> to vector<8x16x16xf32>
    %59 = arith.mulf %57, %58 : vector<8x16x16xf32>
    %60 = arith.addf %54, %59 : vector<8x16x16xf32>
    %c0_i32_36 = arith.constant 0 : i32
    %61 = arith.addi %49, %c0_i32_36 : i32
    %62 = arith.index_cast %61 : i32 to index
    %c9 = arith.constant 9 : index
    %c0_37 = arith.constant 0 : index
    %63 = vector.load %arg9[%62, %c9, %c0_37] : memref<18x32x16xf32, #tpu.memory_space<vmem>>, vector<8x16x16xf32>
    %64 = vector.broadcast %31 : vector<1x1x16xf32> to vector<8x16x16xf32>
    %65 = arith.mulf %63, %64 : vector<8x16x16xf32>
    %66 = arith.addf %60, %65 : vector<8x16x16xf32>
    %c1_i32 = arith.constant 1 : i32
    %67 = arith.addi %49, %c1_i32 : i32
    %68 = arith.index_cast %67 : i32 to index
    %c7_38 = arith.constant 7 : index
    %c0_39 = arith.constant 0 : index
    %69 = vector.load %arg9[%68, %c7_38, %c0_39] : memref<18x32x16xf32, #tpu.memory_space<vmem>>, vector<8x16x16xf32>
    %70 = vector.broadcast %33 : vector<1x1x16xf32> to vector<8x16x16xf32>
    %71 = arith.mulf %69, %70 : vector<8x16x16xf32>
    %72 = arith.addf %66, %71 : vector<8x16x16xf32>
    %c1_i32_40 = arith.constant 1 : i32
    %73 = arith.addi %49, %c1_i32_40 : i32
    %74 = arith.index_cast %73 : i32 to index
    %c8_41 = arith.constant 8 : index
    %c0_42 = arith.constant 0 : index
    %75 = vector.load %arg9[%74, %c8_41, %c0_42] : memref<18x32x16xf32, #tpu.memory_space<vmem>>, vector<8x16x16xf32>
    %76 = vector.broadcast %35 : vector<1x1x16xf32> to vector<8x16x16xf32>
    %77 = arith.mulf %75, %76 : vector<8x16x16xf32>
    %78 = arith.addf %72, %77 : vector<8x16x16xf32>
    %c1_i32_43 = arith.constant 1 : i32
    %79 = arith.addi %49, %c1_i32_43 : i32
    %80 = arith.index_cast %79 : i32 to index
    %c9_44 = arith.constant 9 : index
    %c0_45 = arith.constant 0 : index
    %81 = vector.load %arg9[%80, %c9_44, %c0_45] : memref<18x32x16xf32, #tpu.memory_space<vmem>>, vector<8x16x16xf32>
    %82 = vector.broadcast %37 : vector<1x1x16xf32> to vector<8x16x16xf32>
    %83 = arith.mulf %81, %82 : vector<8x16x16xf32>
    %84 = arith.addf %78, %83 : vector<8x16x16xf32>
    %c2_i32 = arith.constant 2 : i32
    %85 = arith.addi %49, %c2_i32 : i32
    %86 = arith.index_cast %85 : i32 to index
    %c7_46 = arith.constant 7 : index
    %c0_47 = arith.constant 0 : index
    %87 = vector.load %arg9[%86, %c7_46, %c0_47] : memref<18x32x16xf32, #tpu.memory_space<vmem>>, vector<8x16x16xf32>
    %88 = vector.broadcast %39 : vector<1x1x16xf32> to vector<8x16x16xf32>
    %89 = arith.mulf %87, %88 : vector<8x16x16xf32>
    %90 = arith.addf %84, %89 : vector<8x16x16xf32>
    %c2_i32_48 = arith.constant 2 : i32
    %91 = arith.addi %49, %c2_i32_48 : i32
    %92 = arith.index_cast %91 : i32 to index
    %c8_49 = arith.constant 8 : index
    %c0_50 = arith.constant 0 : index
    %93 = vector.load %arg9[%92, %c8_49, %c0_50] : memref<18x32x16xf32, #tpu.memory_space<vmem>>, vector<8x16x16xf32>
    %94 = vector.broadcast %41 : vector<1x1x16xf32> to vector<8x16x16xf32>
    %95 = arith.mulf %93, %94 : vector<8x16x16xf32>
    %96 = arith.addf %90, %95 : vector<8x16x16xf32>
    %c2_i32_51 = arith.constant 2 : i32
    %97 = arith.addi %49, %c2_i32_51 : i32
    %98 = arith.index_cast %97 : i32 to index
    %c9_52 = arith.constant 9 : index
    %c0_53 = arith.constant 0 : index
    %99 = vector.load %arg9[%98, %c9_52, %c0_53] : memref<18x32x16xf32, #tpu.memory_space<vmem>>, vector<8x16x16xf32>
    %100 = vector.broadcast %43 : vector<1x1x16xf32> to vector<8x16x16xf32>
    %101 = arith.mulf %99, %100 : vector<8x16x16xf32>
    %102 = arith.addf %96, %101 : vector<8x16x16xf32>
    %103 = vector.broadcast %45 : vector<1x1x16xf32> to vector<8x16x16xf32>
    %104 = arith.addf %102, %103 : vector<8x16x16xf32>
    %cst_54 = arith.constant 0.000000e+00 : f32
    %cst_55 = arith.constant 6.000000e+00 : f32
    %105 = vector.broadcast %cst_54 : f32 to vector<8x16x16xf32>
    %106 = arith.maximumf %105, %104 : vector<8x16x16xf32>
    %107 = vector.broadcast %cst_55 : f32 to vector<8x16x16xf32>
    %108 = arith.minimumf %107, %106 : vector<8x16x16xf32>
    %109 = vector.shape_cast %108 : vector<8x16x16xf32> to vector<128x16xf32>
    %cst_56 = arith.constant dense<0.000000e+00> : vector<128x4xf32>
    %110 = tpu.matmul %109, %46, %cst_56 {dimension_numbers = #tpu.dot_dimension_numbers<[1], [0], [0], [1], [0, 0, 1, 1], [], []>} : vector<128x16xf32>, vector<16x4xf32>, vector<128x4xf32> -> vector<128x4xf32>
    %111 = vector.broadcast %47 : vector<1x4xf32> to vector<128x4xf32>
    %112 = arith.addf %110, %111 : vector<128x4xf32>
    %c16_i32 = arith.constant 16 : i32
    %113 = arith.muli %49, %c16_i32 : i32
    %c0_57 = arith.constant 0 : index
    %114 = arith.index_cast %113 : i32 to index
    %c0_58 = arith.constant 0 : index
    %115 = vector.load %arg1[%c0_57, %114, %c0_58] : memref<1x256x4xf32, #tpu.memory_space<vmem>>, vector<1x128x4xf32>
    %116 = vector.shape_cast %115 : vector<1x128x4xf32> to vector<128x4xf32>
    %117 = arith.addf %112, %116 : vector<128x4xf32>
    %c16_i32_59 = arith.constant 16 : i32
    %118 = arith.muli %49, %c16_i32_59 : i32
    %c0_60 = arith.constant 0 : index
    %119 = arith.index_cast %118 : i32 to index
    %c0_61 = arith.constant 0 : index
    %120 = vector.load %arg8[%c0_60, %119, %c0_61] : memref<1x256x4xf32, #tpu.memory_space<vmem>>, vector<1x128x4xf32>
    %121 = vector.shape_cast %120 : vector<1x128x4xf32> to vector<128x4xf32>
    %122 = vector.shape_cast %117 : vector<128x4xf32> to vector<1x128x4xf32>
    tpu.vector_store %arg8[%c0_60, %119, %c0_61], %122 {strides = array<i32>} : memref<1x256x4xf32, #tpu.memory_space<vmem>>, vector<1x128x4xf32>,
    %c1_i32_62 = arith.constant 1 : i32
    %c8_i32_63 = arith.constant 8 : i32
    %123 = arith.muli %c1_i32_62, %c8_i32_63 : i32
    %124 = tpu.assume_multiple %123, 8 : i32
    %c0_i32_64 = arith.constant 0 : i32
    %125 = arith.addi %124, %c0_i32_64 : i32
    %126 = arith.index_cast %125 : i32 to index
    %c7_65 = arith.constant 7 : index
    %c0_66 = arith.constant 0 : index
    %127 = vector.load %arg9[%126, %c7_65, %c0_66] : memref<18x32x16xf32, #tpu.memory_space<vmem>>, vector<8x16x16xf32>
    %128 = vector.broadcast %27 : vector<1x1x16xf32> to vector<8x16x16xf32>
    %129 = arith.mulf %127, %128 : vector<8x16x16xf32>
    %c0_i32_67 = arith.constant 0 : i32
    %130 = arith.addi %124, %c0_i32_67 : i32
    %131 = arith.index_cast %130 : i32 to index
    %c8_68 = arith.constant 8 : index
    %c0_69 = arith.constant 0 : index
    %132 = vector.load %arg9[%131, %c8_68, %c0_69] : memref<18x32x16xf32, #tpu.memory_space<vmem>>, vector<8x16x16xf32>
    %133 = vector.broadcast %29 : vector<1x1x16xf32> to vector<8x16x16xf32>
    %134 = arith.mulf %132, %133 : vector<8x16x16xf32>
    %135 = arith.addf %129, %134 : vector<8x16x16xf32>
    %c0_i32_70 = arith.constant 0 : i32
    %136 = arith.addi %124, %c0_i32_70 : i32
    %137 = arith.index_cast %136 : i32 to index
    %c9_71 = arith.constant 9 : index
    %c0_72 = arith.constant 0 : index
    %138 = vector.load %arg9[%137, %c9_71, %c0_72] : memref<18x32x16xf32, #tpu.memory_space<vmem>>, vector<8x16x16xf32>
    %139 = vector.broadcast %31 : vector<1x1x16xf32> to vector<8x16x16xf32>
    %140 = arith.mulf %138, %139 : vector<8x16x16xf32>
    %141 = arith.addf %135, %140 : vector<8x16x16xf32>
    %c1_i32_73 = arith.constant 1 : i32
    %142 = arith.addi %124, %c1_i32_73 : i32
    %143 = arith.index_cast %142 : i32 to index
    %c7_74 = arith.constant 7 : index
    %c0_75 = arith.constant 0 : index
    %144 = vector.load %arg9[%143, %c7_74, %c0_75] : memref<18x32x16xf32, #tpu.memory_space<vmem>>, vector<8x16x16xf32>
    %145 = vector.broadcast %33 : vector<1x1x16xf32> to vector<8x16x16xf32>
    %146 = arith.mulf %144, %145 : vector<8x16x16xf32>
    %147 = arith.addf %141, %146 : vector<8x16x16xf32>
    %c1_i32_76 = arith.constant 1 : i32
    %148 = arith.addi %124, %c1_i32_76 : i32
    %149 = arith.index_cast %148 : i32 to index
    %c8_77 = arith.constant 8 : index
    %c0_78 = arith.constant 0 : index
    %150 = vector.load %arg9[%149, %c8_77, %c0_78] : memref<18x32x16xf32, #tpu.memory_space<vmem>>, vector<8x16x16xf32>
    %151 = vector.broadcast %35 : vector<1x1x16xf32> to vector<8x16x16xf32>
    %152 = arith.mulf %150, %151 : vector<8x16x16xf32>
    %153 = arith.addf %147, %152 : vector<8x16x16xf32>
    %c1_i32_79 = arith.constant 1 : i32
    %154 = arith.addi %124, %c1_i32_79 : i32
    %155 = arith.index_cast %154 : i32 to index
    %c9_80 = arith.constant 9 : index
    %c0_81 = arith.constant 0 : index
    %156 = vector.load %arg9[%155, %c9_80, %c0_81] : memref<18x32x16xf32, #tpu.memory_space<vmem>>, vector<8x16x16xf32>
    %157 = vector.broadcast %37 : vector<1x1x16xf32> to vector<8x16x16xf32>
    %158 = arith.mulf %156, %157 : vector<8x16x16xf32>
    %159 = arith.addf %153, %158 : vector<8x16x16xf32>
    %c2_i32_82 = arith.constant 2 : i32
    %160 = arith.addi %124, %c2_i32_82 : i32
    %161 = arith.index_cast %160 : i32 to index
    %c7_83 = arith.constant 7 : index
    %c0_84 = arith.constant 0 : index
    %162 = vector.load %arg9[%161, %c7_83, %c0_84] : memref<18x32x16xf32, #tpu.memory_space<vmem>>, vector<8x16x16xf32>
    %163 = vector.broadcast %39 : vector<1x1x16xf32> to vector<8x16x16xf32>
    %164 = arith.mulf %162, %163 : vector<8x16x16xf32>
    %165 = arith.addf %159, %164 : vector<8x16x16xf32>
    %c2_i32_85 = arith.constant 2 : i32
    %166 = arith.addi %124, %c2_i32_85 : i32
    %167 = arith.index_cast %166 : i32 to index
    %c8_86 = arith.constant 8 : index
    %c0_87 = arith.constant 0 : index
    %168 = vector.load %arg9[%167, %c8_86, %c0_87] : memref<18x32x16xf32, #tpu.memory_space<vmem>>, vector<8x16x16xf32>
    %169 = vector.broadcast %41 : vector<1x1x16xf32> to vector<8x16x16xf32>
    %170 = arith.mulf %168, %169 : vector<8x16x16xf32>
    %171 = arith.addf %165, %170 : vector<8x16x16xf32>
    %c2_i32_88 = arith.constant 2 : i32
    %172 = arith.addi %124, %c2_i32_88 : i32
    %173 = arith.index_cast %172 : i32 to index
    %c9_89 = arith.constant 9 : index
    %c0_90 = arith.constant 0 : index
    %174 = vector.load %arg9[%173, %c9_89, %c0_90] : memref<18x32x16xf32, #tpu.memory_space<vmem>>, vector<8x16x16xf32>
    %175 = vector.broadcast %43 : vector<1x1x16xf32> to vector<8x16x16xf32>
    %176 = arith.mulf %174, %175 : vector<8x16x16xf32>
    %177 = arith.addf %171, %176 : vector<8x16x16xf32>
    %178 = vector.broadcast %45 : vector<1x1x16xf32> to vector<8x16x16xf32>
    %179 = arith.addf %177, %178 : vector<8x16x16xf32>
    %cst_91 = arith.constant 0.000000e+00 : f32
    %cst_92 = arith.constant 6.000000e+00 : f32
    %180 = vector.broadcast %cst_91 : f32 to vector<8x16x16xf32>
    %181 = arith.maximumf %180, %179 : vector<8x16x16xf32>
    %182 = vector.broadcast %cst_92 : f32 to vector<8x16x16xf32>
    %183 = arith.minimumf %182, %181 : vector<8x16x16xf32>
    %184 = vector.shape_cast %183 : vector<8x16x16xf32> to vector<128x16xf32>
    %cst_93 = arith.constant dense<0.000000e+00> : vector<128x4xf32>
    %185 = tpu.matmul %184, %46, %cst_93 {dimension_numbers = #tpu.dot_dimension_numbers<[1], [0], [0], [1], [0, 0, 1, 1], [], []>} : vector<128x16xf32>, vector<16x4xf32>, vector<128x4xf32> -> vector<128x4xf32>
    %186 = vector.broadcast %47 : vector<1x4xf32> to vector<128x4xf32>
    %187 = arith.addf %185, %186 : vector<128x4xf32>
    %c16_i32_94 = arith.constant 16 : i32
    %188 = arith.muli %124, %c16_i32_94 : i32
    %c0_95 = arith.constant 0 : index
    %189 = arith.index_cast %188 : i32 to index
    %c0_96 = arith.constant 0 : index
    %190 = vector.load %arg1[%c0_95, %189, %c0_96] : memref<1x256x4xf32, #tpu.memory_space<vmem>>, vector<1x128x4xf32>
    %191 = vector.shape_cast %190 : vector<1x128x4xf32> to vector<128x4xf32>
    %192 = arith.addf %187, %191 : vector<128x4xf32>
    %c16_i32_97 = arith.constant 16 : i32
    %193 = arith.muli %124, %c16_i32_97 : i32
    %c0_98 = arith.constant 0 : index
    %194 = arith.index_cast %193 : i32 to index
    %c0_99 = arith.constant 0 : index
    %195 = vector.load %arg8[%c0_98, %194, %c0_99] : memref<1x256x4xf32, #tpu.memory_space<vmem>>, vector<1x128x4xf32>
    %196 = vector.shape_cast %195 : vector<1x128x4xf32> to vector<128x4xf32>
    %197 = vector.shape_cast %192 : vector<128x4xf32> to vector<1x128x4xf32>
    tpu.vector_store %arg8[%c0_98, %194, %c0_99], %197 {strides = array<i32>} : memref<1x256x4xf32, #tpu.memory_space<vmem>>, vector<1x128x4xf32>,
    %c2_i32_100 = arith.constant 2 : i32
    return
  }
  func.func @transform_0(%arg0: i32) -> (i32, i32, i32) {
    %c0_i32 = arith.constant 0 : i32
    %c0_i32_0 = arith.constant 0 : i32
    %c0_i32_1 = arith.constant 0 : i32
    return %arg0, %c0_i32, %c0_i32_0 : i32, i32, i32
  }
  func.func @transform_1(%arg0: i32) -> (i32, i32) {
    %c0_i32 = arith.constant 0 : i32
    %c0_i32_0 = arith.constant 0 : i32
    %c0_i32_1 = arith.constant 0 : i32
    return %c0_i32, %c0_i32_0 : i32, i32
  }
  func.func @transform_2(%arg0: i32) -> (i32, i32) {
    %c0_i32 = arith.constant 0 : i32
    %c0_i32_0 = arith.constant 0 : i32
    %c0_i32_1 = arith.constant 0 : i32
    return %c0_i32, %c0_i32_0 : i32, i32
  }
  func.func @transform_3(%arg0: i32) -> (i32, i32) {
    %c0_i32 = arith.constant 0 : i32
    %c0_i32_0 = arith.constant 0 : i32
    %c0_i32_1 = arith.constant 0 : i32
    return %c0_i32, %c0_i32_0 : i32, i32
  }
  func.func @transform_4(%arg0: i32) -> (i32, i32) {
    %c0_i32 = arith.constant 0 : i32
    %c0_i32_0 = arith.constant 0 : i32
    %c0_i32_1 = arith.constant 0 : i32
    return %c0_i32, %c0_i32_0 : i32, i32
  }
  func.func @transform_5(%arg0: i32) -> (i32, i32) {
    %c0_i32 = arith.constant 0 : i32
    %c0_i32_0 = arith.constant 0 : i32
    %c0_i32_1 = arith.constant 0 : i32
    return %c0_i32, %c0_i32_0 : i32, i32
  }
  func.func @transform_6(%arg0: i32) -> (i32, i32) {
    %c0_i32 = arith.constant 0 : i32
    %c0_i32_0 = arith.constant 0 : i32
    %c0_i32_1 = arith.constant 0 : i32
    return %c0_i32, %c0_i32_0 : i32, i32
  }
  func.func @transform_7(%arg0: i32) -> (i32, i32, i32) {
    %c0_i32 = arith.constant 0 : i32
    %c0_i32_0 = arith.constant 0 : i32
    %c0_i32_1 = arith.constant 0 : i32
    return %arg0, %c0_i32, %c0_i32_0 : i32, i32, i32
  }
}

</mosaic_0001>

<llo_original>
// kernel: tpu_custom_call.1
$region0: #{tpu_custom_call.1}
  #allocation0 [shape = 'u32[]', space=smem, size = 0x4, offset = 0x4, fixed_abs, tag = 'smem constant byte address 0x4 - core index']
  #allocation1 [shape = 'u32[144,128]{1,0:T(1,128)}', space=vmem, size = 0x12000, scoped, tag = 'internal scratch']
  #allocation2 [shape = 'f32[18,32,16]{2,1,0:T(8,128)}', space=vmem, size = 0x48000, scoped, tag = 'scratch operand']
  %s0 = inlined_call_operand.vmem [shape: f32[2,256,4], index: 0, kind: input, shape index: {}]
  %s1 = inlined_call_operand.vmem [shape: f32[4,16], index: 1, kind: input, shape index: {}]
  %s2 = inlined_call_operand.vmem [shape: f32[1,16], index: 2, kind: input, shape index: {}]
  %s3 = inlined_call_operand.vmem [shape: f32[9,16], index: 3, kind: input, shape index: {}]
  %s4 = inlined_call_operand.vmem [shape: f32[1,16], index: 4, kind: input, shape index: {}]
  %s5 = inlined_call_operand.vmem [shape: f32[16,4], index: 5, kind: input, shape index: {}]
  %s6 = inlined_call_operand.vmem [shape: f32[1,4], index: 6, kind: input, shape index: {}]
  %s7 = inlined_call_operand.vmem [shape: f32[2,256,4], index: 7, kind: output, shape index: {}]
  %s8 = sld [smem:[#allocation0]]
  $region61: #{tpu_custom_call.1} parent=0
    _
  %s10 = ssub.s32 1, %s8
  %s11 = scalar_select 0, %s10, %s8
  loop: start=0, step=1, limit=4
  $region2: #{tpu_custom_call.1} parent=0 // loop_pre_header
    _
  $region3: #{tpu_custom_call.1} parent=0 // loop_header
    %s13 = sphi 0, %s17
    %p14 = scmp.ge.s32.totalorder %s13, 4
    %s23 = sphi 0, %s25
    %s26 = sphi 0, %s23
    %s27 = sphi 0, %s26
    %s43 = sphi 0, %s27
    %s47 = sphi 0, %s47
    %s49 = sphi 0, %s47
    %s50 = sphi 0, %s49
    %s64 = sphi 0, %s50
    %s68 = sphi 0, %s68
    %s70 = sphi 0, %s68
    %s71 = sphi 0, %s70
    %s85 = sphi 0, %s71
    %s89 = sphi 0, %s89
    %s91 = sphi 0, %s89
    %s92 = sphi 0, %s91
    %s106 = sphi 0, %s92
    %s110 = sphi 0, %s110
    %s112 = sphi 0, %s110
    %s113 = sphi 0, %s112
    %s127 = sphi 0, %s113
    %s131 = sphi 0, %s131
    %s133 = sphi 0, %s131
    %s134 = sphi 0, %s133
    %s148 = sphi 0, %s134
    %s152 = sphi 0, %s152
    %s154 = sphi 0, %s152
    %s155 = sphi 0, %s154
    %s169 = sphi 0, %s155
    %s175 = sphi 0, %s177
    %s178 = sphi 0, %s175
    %s179 = sphi 0, %s178
    %s195 = sphi 0, %s179
  $region4: #{tpu_custom_call.1} parent=0 // loop_header_branch
    %16 = sbr.rel (%p14) target = $region8
  $region5: #{tpu_custom_call.1} parent=0 // loop_body
    %s18 = ssub.s32 %s13, 1
    %s19 = ssub.s32 %s13, 2
    %s20 = sadd.s32 %s13, 1
    %s21 = ssub.s32 %s13, %s20
    %p22 = scmp.eq.s32.totalorder %s21, 0
    %s24 = sadd.s32 %s23, 1
    %s25 = scalar_select %p22, %s23, %s24
    %p28 = pneg %p22
    %p29 = scmp.eq.s32.totalorder %s13, 1
    %p30 = por %p28, %p29
    %p31 = scmp.ne.s32.totalorder %s23, %s26
    %p32 = scmp.eq.s32.totalorder %s13, 0
    %p33 = por %p31, %p32
    %p34 = scmp.ne.s32.totalorder %s23, %s26
    %p35 = scmp.eq.s32.totalorder %s18, 1
    %p36 = por %p34, %p35
    %p37 = scmp.ne.s32.totalorder %s26, %s27
    %p38 = scmp.eq.s32.totalorder %s18, 0
    %p39 = por %p37, %p38
    %p40 = scmp.ne.s32.totalorder %s26, %s27
    %p41 = scmp.eq.s32.totalorder %s19, 1
    %p42 = por %p40, %p41
    %p44 = scmp.ne.s32.totalorder %s27, %s43
    %p45 = scmp.eq.s32.totalorder %s19, 0
    %p46 = por %p44, %p45
    %s48 = sadd.s32 %s47, 1
    %p51 = scmp.eq.s32.totalorder %s13, 1
    %p52 = scmp.ne.s32.totalorder %s47, %s49
    %p53 = scmp.eq.s32.totalorder %s13, 0
    %p54 = por %p52, %p53
    %p55 = scmp.ne.s32.totalorder %s47, %s49
    %p56 = scmp.eq.s32.totalorder %s18, 1
    %p57 = por %p55, %p56
    %p58 = scmp.ne.s32.totalorder %s49, %s50
    %p59 = scmp.eq.s32.totalorder %s18, 0
    %p60 = por %p58, %p59
    %p61 = scmp.ne.s32.totalorder %s49, %s50
    %p62 = scmp.eq.s32.totalorder %s19, 1
    %p63 = por %p61, %p62
    %p65 = scmp.ne.s32.totalorder %s50, %s64
    %p66 = scmp.eq.s32.totalorder %s19, 0
    %p67 = por %p65, %p66
    %s69 = sadd.s32 %s68, 1
    %p72 = scmp.eq.s32.totalorder %s13, 1
    %p73 = scmp.ne.s32.totalorder %s68, %s70
    %p74 = scmp.eq.s32.totalorder %s13, 0
    %p75 = por %p73, %p74
    %p76 = scmp.ne.s32.totalorder %s68, %s70
    %p77 = scmp.eq.s32.totalorder %s18, 1
    %p78 = por %p76, %p77
    %p79 = scmp.ne.s32.totalorder %s70, %s71
    %p80 = scmp.eq.s32.totalorder %s18, 0
    %p81 = por %p79, %p80
    %p82 = scmp.ne.s32.totalorder %s70, %s71
    %p83 = scmp.eq.s32.totalorder %s19, 1
    %p84 = por %p82, %p83
    %p86 = scmp.ne.s32.totalorder %s71, %s85
    %p87 = scmp.eq.s32.totalorder %s19, 0
    %p88 = por %p86, %p87
    %s90 = sadd.s32 %s89, 1
    %p93 = scmp.eq.s32.totalorder %s13, 1
    %p94 = scmp.ne.s32.totalorder %s89, %s91
    %p95 = scmp.eq.s32.totalorder %s13, 0
    %p96 = por %p94, %p95
    %p97 = scmp.ne.s32.totalorder %s89, %s91
    %p98 = scmp.eq.s32.totalorder %s18, 1
    %p99 = por %p97, %p98
    %p100 = scmp.ne.s32.totalorder %s91, %s92
    %p101 = scmp.eq.s32.totalorder %s18, 0
    %p102 = por %p100, %p101
    %p103 = scmp.ne.s32.totalorder %s91, %s92
    %p104 = scmp.eq.s32.totalorder %s19, 1
    %p105 = por %p103, %p104
    %p107 = scmp.ne.s32.totalorder %s92, %s106
    %p108 = scmp.eq.s32.totalorder %s19, 0
    %p109 = por %p107, %p108
    %s111 = sadd.s32 %s110, 1
    %p114 = scmp.eq.s32.totalorder %s13, 1
    %p115 = scmp.ne.s32.totalorder %s110, %s112
    %p116 = scmp.eq.s32.totalorder %s13, 0
    %p117 = por %p115, %p116
    %p118 = scmp.ne.s32.totalorder %s110, %s112
    %p119 = scmp.eq.s32.totalorder %s18, 1
    %p120 = por %p118, %p119
    %p121 = scmp.ne.s32.totalorder %s112, %s113
    %p122 = scmp.eq.s32.totalorder %s18, 0
    %p123 = por %p121, %p122
    %p124 = scmp.ne.s32.totalorder %s112, %s113
    %p125 = scmp.eq.s32.totalorder %s19, 1
    %p126 = por %p124, %p125
    %p128 = scmp.ne.s32.totalorder %s113, %s127
    %p129 = scmp.eq.s32.totalorder %s19, 0
    %p130 = por %p128, %p129
    %s132 = sadd.s32 %s131, 1
    %p135 = scmp.eq.s32.totalorder %s13, 1
    %p136 = scmp.ne.s32.totalorder %s131, %s133
    %p137 = scmp.eq.s32.totalorder %s13, 0
    %p138 = por %p136, %p137
    %p139 = scmp.ne.s32.totalorder %s131, %s133
    %p140 = scmp.eq.s32.totalorder %s18, 1
    %p141 = por %p139, %p140
    %p142 = scmp.ne.s32.totalorder %s133, %s134
    %p143 = scmp.eq.s32.totalorder %s18, 0
    %p144 = por %p142, %p143
    %p145 = scmp.ne.s32.totalorder %s133, %s134
    %p146 = scmp.eq.s32.totalorder %s19, 1
    %p147 = por %p145, %p146
    %p149 = scmp.ne.s32.totalorder %s134, %s148
    %p150 = scmp.eq.s32.totalorder %s19, 0
    %p151 = por %p149, %p150
    %s153 = sadd.s32 %s152, 1
    %p156 = scmp.eq.s32.totalorder %s13, 1
    %p157 = scmp.ne.s32.totalorder %s152, %s154
    %p158 = scmp.eq.s32.totalorder %s13, 0
    %p159 = por %p157, %p158
    %p160 = scmp.ne.s32.totalorder %s152, %s154
    %p161 = scmp.eq.s32.totalorder %s18, 1
    %p162 = por %p160, %p161
    %p163 = scmp.ne.s32.totalorder %s154, %s155
    %p164 = scmp.eq.s32.totalorder %s18, 0
    %p165 = por %p163, %p164
    %p166 = scmp.ne.s32.totalorder %s154, %s155
    %p167 = scmp.eq.s32.totalorder %s19, 1
    %p168 = por %p166, %p167
    %p170 = scmp.ne.s32.totalorder %s155, %s169
    %p171 = scmp.eq.s32.totalorder %s19, 0
    %p172 = por %p170, %p171
    %s173 = ssub.s32 %s13, %s20
    %p174 = scmp.eq.s32.totalorder %s173, 0
    %s176 = sadd.s32 %s175, 1
    %s177 = scalar_select %p174, %s175, %s176
    %p180 = pneg %p174
    %p181 = scmp.eq.s32.totalorder %s13, 1
    %p182 = por %p180, %p181
    %p183 = scmp.ne.s32.totalorder %s175, %s178
    %p184 = scmp.eq.s32.totalorder %s13, 0
    %p185 = por %p183, %p184
    %p186 = scmp.ne.s32.totalorder %s175, %s178
    %p187 = scmp.eq.s32.totalorder %s18, 1
    %p188 = por %p186, %p187
    %p189 = scmp.ne.s32.totalorder %s178, %s179
    %p190 = scmp.eq.s32.totalorder %s18, 0
    %p191 = por %p189, %p190
    %p192 = scmp.ne.s32.totalorder %s178, %s179
    %p193 = scmp.eq.s32.totalorder %s19, 1
    %p194 = por %p192, %p193
    %p196 = scmp.ne.s32.totalorder %s179, %s195
    %p197 = scmp.eq.s32.totalorder %s19, 0
    %p198 = por %p196, %p197
    %p199 = scmp.le.s32.totalorder 1, %s13
    %p200 = scmp.lt.s32.totalorder %s13, 3
    %p201 = pnand %p199, %p200
    %p202 = pneg %p201
    // Predicated region
    $region9: #{tpu_custom_call.1} parent=5 // pred_check
      _
    $region10: #{tpu_custom_call.1} parent=5 // pred_check_branch
      %204 = sbr.rel (%p201) target = $region12
    $region11: #{tpu_custom_call.1} parent=5 // pred_region
      %s205 = ssub.s32 %s13, 1
      // Predicated region
      $region13: #{tpu_custom_call.1} parent=11 // pred_check
        %p206 = pneg %p60
      $region14: #{tpu_custom_call.1} parent=11 // pred_check_branch
        %208 = sbr.rel (%p206) target = $region16
      $region15: #{tpu_custom_call.1} parent=11 // pred_region
        _
      $region16: #{tpu_custom_call.1} parent=11 // pred_fallthru
        _
      // Predicated region
      $region17: #{tpu_custom_call.1} parent=11 // pred_check
        %p209 = pneg %p81
      $region18: #{tpu_custom_call.1} parent=11 // pred_check_branch
        %211 = sbr.rel (%p209) target = $region20
      $region19: #{tpu_custom_call.1} parent=11 // pred_region
        _
      $region20: #{tpu_custom_call.1} parent=11 // pred_fallthru
        _
      // Predicated region
      $region21: #{tpu_custom_call.1} parent=11 // pred_check
        %p212 = pneg %p102
      $region22: #{tpu_custom_call.1} parent=11 // pred_check_branch
        %214 = sbr.rel (%p212) target = $region24
      $region23: #{tpu_custom_call.1} parent=11 // pred_region
        _
      $region24: #{tpu_custom_call.1} parent=11 // pred_fallthru
        _
      // Predicated region
      $region25: #{tpu_custom_call.1} parent=11 // pred_check
        %p215 = pneg %p123
      $region26: #{tpu_custom_call.1} parent=11 // pred_check_branch
        %217 = sbr.rel (%p215) target = $region28
      $region27: #{tpu_custom_call.1} parent=11 // pred_region
        _
      $region28: #{tpu_custom_call.1} parent=11 // pred_fallthru
        _
      // Predicated region
      $region29: #{tpu_custom_call.1} parent=11 // pred_check
        %p218 = pneg %p144
      $region30: #{tpu_custom_call.1} parent=11 // pred_check_branch
        %220 = sbr.rel (%p218) target = $region32
      $region31: #{tpu_custom_call.1} parent=11 // pred_region
        _
      $region32: #{tpu_custom_call.1} parent=11 // pred_fallthru
        _
      // Predicated region
      $region33: #{tpu_custom_call.1} parent=11 // pred_check
        %p221 = pneg %p165
      $region34: #{tpu_custom_call.1} parent=11 // pred_check_branch
        %223 = sbr.rel (%p221) target = $region36
      $region35: #{tpu_custom_call.1} parent=11 // pred_region
        _
      $region36: #{tpu_custom_call.1} parent=11 // pred_fallthru
        _
    $region12: #{tpu_custom_call.1} parent=5 // pred_fallthru
      _
    %p224 = scmp.lt.s32.totalorder %s13, 2
    // Predicated region
    $region37: #{tpu_custom_call.1} parent=5 // pred_check
      %p225 = pneg %p224
    $region38: #{tpu_custom_call.1} parent=5 // pred_check_branch
      %227 = sbr.rel (%p225) target = $region40
    $region39: #{tpu_custom_call.1} parent=5 // pred_region
      // Predicated region
      $region41: #{tpu_custom_call.1} parent=39 // pred_check
        %p228 = pneg %p33
      $region42: #{tpu_custom_call.1} parent=39 // pred_check_branch
        %230 = sbr.rel (%p228) target = $region44
      $region43: #{tpu_custom_call.1} parent=39 // pred_region
        %p231 = scmp.lt.s32.totalorder %s13, 1
        %s232 = scalar_select %p231, %s13, 1
        %s233 = smul.addr %s232, 32
        %s234 = smul.addr %s233, 8
        %s235 = scalar_lea.vmem %s0, %s234
      $region44: #{tpu_custom_call.1} parent=39 // pred_fallthru
        _
    $region40: #{tpu_custom_call.1} parent=5 // pred_fallthru
      _
    %p236 = scmp.le.s32.totalorder 1, %s13
    %p237 = scmp.lt.s32.totalorder %s13, 3
    %p238 = pnand %p236, %p237
    %p239 = pneg %p238
    // Predicated region
    $region45: #{tpu_custom_call.1} parent=5 // pred_check
      _
    $region46: #{tpu_custom_call.1} parent=5 // pred_check_branch
      %241 = sbr.rel (%p238) target = $region48
    $region47: #{tpu_custom_call.1} parent=5 // pred_region
      %s242 = ssub.s32 %s13, 1
      %p243 = scmp.lt.s32.totalorder %s18, 1
      %s244 = scalar_select %p243, %s18, 1
      %s245 = smul.addr %s244, 32
      %s246 = smul.addr %s245, 8
      %s247 = scalar_lea.vmem %s0, %s246
      %p248 = pneg %p39
      %p249 = pneg %p36
      %p250 = pneg %p60
      %p251 = pneg %p57
      %p252 = pneg %p81
      %p253 = pneg %p78
      %p254 = pneg %p102
      %p255 = pneg %p99
      %p256 = pneg %p123
      %p257 = pneg %p120
      %p258 = pneg %p144
      %p259 = pneg %p141
      %p260 = pneg %p165
      %p261 = pneg %p162
      %p262 = pneg %p191
      %p263 = pneg %p188
      %p264 = scmp.lt.s32.totalorder %s18, 1
      %s265 = scalar_select %p264, %s18, 1
      %s266 = smul.addr %s265, 32
      %s267 = smul.addr %s266, 8
      %s268 = scalar_lea.vmem %s7, %s267
      %p269 = scmp.lt.s32.totalorder %s18, 1
      %s270 = scalar_select %p269, %s18, 1
      %s271 = smul.addr %s270, 32
      %s272 = smul.addr %s271, 8
      %s273 = scalar_lea.vmem %s0, %s272
      %p274 = scmp.lt.s32.totalorder %s18, 1
      %s275 = scalar_select %p274, %s18, 1
      %s276 = smul.addr %s275, 32
      %s277 = smul.addr %s276, 8
      %s278 = scalar_lea.vmem %s7, %s277
      %vm279 = vcmask 130048
      %280 = vst.msk [vmem:[#allocation2] sm:$0xff] %vm279, 0.0
      %281 = vst.msk [vmem:[#allocation2 + $0x8] sm:$0xff] %vm279, 0.0
      %282 = vst.msk [vmem:[#allocation2 + $0x10] sm:$0xff] %vm279, 0.0
      %283 = vst.msk [vmem:[#allocation2 + $0x18] sm:$0xff] %vm279, 0.0
      %s284 = scalar_lea.vmem [#allocation2], 544
      %285 = vst.msk [vmem:[%s284] sm:$0xff] %vm279, 0.0
      %286 = vst.msk [vmem:[%s284 + $0x8] sm:$0xff] %vm279, 0.0
      %287 = vst.msk [vmem:[%s284 + $0x10] sm:$0xff] %vm279, 0.0
      %288 = vst.msk [vmem:[%s284 + $0x18] sm:$0xff] %vm279, 0.0
      %s289 = scalar_lea.vmem [#allocation2], 32
      %290 = vst.msk [vmem:[%s289] sm:$0xff] %vm279, 0.0
      %291 = vst.msk [vmem:[%s289 + $0x20] sm:$0xff] %vm279, 0.0
      %292 = vst.msk [vmem:[%s289 + $0x40] sm:$0xff] %vm279, 0.0
      %293 = vst.msk [vmem:[%s289 + $0x60] sm:$0xff] %vm279, 0.0
      %294 = vst.msk [vmem:[%s289 + $0x80] sm:$0xff] %vm279, 0.0
      %295 = vst.msk [vmem:[%s289 + $0xa0] sm:$0xff] %vm279, 0.0
      %296 = vst.msk [vmem:[%s289 + $0xc0] sm:$0xff] %vm279, 0.0
      %297 = vst.msk [vmem:[%s289 + $0xe0] sm:$0xff] %vm279, 0.0
      %298 = vst.msk [vmem:[%s289 + $0x100] sm:$0xff] %vm279, 0.0
      %299 = vst.msk [vmem:[%s289 + $0x120] sm:$0xff] %vm279, 0.0
      %300 = vst.msk [vmem:[%s289 + $0x140] sm:$0xff] %vm279, 0.0
      %301 = vst.msk [vmem:[%s289 + $0x160] sm:$0xff] %vm279, 0.0
      %302 = vst.msk [vmem:[%s289 + $0x180] sm:$0xff] %vm279, 0.0
      %303 = vst.msk [vmem:[%s289 + $0x1a0] sm:$0xff] %vm279, 0.0
      %304 = vst.msk [vmem:[%s289 + $0x1c0] sm:$0xff] %vm279, 0.0
      %305 = vst.msk [vmem:[%s289 + $0x1e0] sm:$0xff] %vm279, 0.0
      %306 = vst.msk [vmem:[%s289 + $0x18] sm:$0xff] %vm279, 0.0
      %307 = vst.msk [vmem:[%s289 + $0x38] sm:$0xff] %vm279, 0.0
      %308 = vst.msk [vmem:[%s289 + $0x58] sm:$0xff] %vm279, 0.0
      %309 = vst.msk [vmem:[%s289 + $0x78] sm:$0xff] %vm279, 0.0
      %310 = vst.msk [vmem:[%s289 + $0x98] sm:$0xff] %vm279, 0.0
      %311 = vst.msk [vmem:[%s289 + $0xb8] sm:$0xff] %vm279, 0.0
      %312 = vst.msk [vmem:[%s289 + $0xd8] sm:$0xff] %vm279, 0.0
      %313 = vst.msk [vmem:[%s289 + $0xf8] sm:$0xff] %vm279, 0.0
      %314 = vst.msk [vmem:[%s289 + $0x118] sm:$0xff] %vm279, 0.0
      %315 = vst.msk [vmem:[%s289 + $0x138] sm:$0xff] %vm279, 0.0
      %316 = vst.msk [vmem:[%s289 + $0x158] sm:$0xff] %vm279, 0.0
      %317 = vst.msk [vmem:[%s289 + $0x178] sm:$0xff] %vm279, 0.0
      %318 = vst.msk [vmem:[%s289 + $0x198] sm:$0xff] %vm279, 0.0
      %319 = vst.msk [vmem:[%s289 + $0x1b8] sm:$0xff] %vm279, 0.0
      %320 = vst.msk [vmem:[%s289 + $0x1d8] sm:$0xff] %vm279, 0.0
      %321 = vst.msk [vmem:[%s289 + $0x1f8] sm:$0xff] %vm279, 0.0
      %v322 = vld [vmem:[%s1] sm:$0xf]
      %v323 = vld [vmem:[%s2] sm:$0x1]
      %v324 = vld [vmem:[%s273] sm:$0xff]
      %v325 = vld [vmem:[%s273 + $0x8] sm:$0xff]
      %v326 = vld [vmem:[%s273 + $0x10] sm:$0xff]
      %v327 = vld [vmem:[%s273 + $0x18] sm:$0xff]
      %v328 = vld [vmem:[%s273 + $0x20] sm:$0xff]
      %v329 = vld [vmem:[%s273 + $0x28] sm:$0xff]
      %v330 = vld [vmem:[%s273 + $0x30] sm:$0xff]
      %v331 = vld [vmem:[%s273 + $0x38] sm:$0xff]
      %v332 = vld [vmem:[%s273 + $0x40] sm:$0xff]
      %v333 = vld [vmem:[%s273 + $0x48] sm:$0xff]
      %v334 = vld [vmem:[%s273 + $0x50] sm:$0xff]
      %v335 = vld [vmem:[%s273 + $0x58] sm:$0xff]
      %v336 = vld [vmem:[%s273 + $0x60] sm:$0xff]
      %v337 = vld [vmem:[%s273 + $0x68] sm:$0xff]
      %v338 = vld [vmem:[%s273 + $0x70] sm:$0xff]
      %v339 = vld [vmem:[%s273 + $0x78] sm:$0xff]
      %v340 = vld [vmem:[%s273 + $0x80] sm:$0xff]
      %v341 = vld [vmem:[%s273 + $0x88] sm:$0xff]
      %v342 = vld [vmem:[%s273 + $0x90] sm:$0xff]
      %v343 = vld [vmem:[%s273 + $0x98] sm:$0xff]
      %v344 = vld [vmem:[%s273 + $0xa0] sm:$0xff]
      %v345 = vld [vmem:[%s273 + $0xa8] sm:$0xff]
      %v346 = vld [vmem:[%s273 + $0xb0] sm:$0xff]
      %v347 = vld [vmem:[%s273 + $0xb8] sm:$0xff]
      %v348 = vld [vmem:[%s273 + $0xc0] sm:$0xff]
      %v349 = vld [vmem:[%s273 + $0xc8] sm:$0xff]
      %v350 = vld [vmem:[%s273 + $0xd0] sm:$0xff]
      %v351 = vld [vmem:[%s273 + $0xd8] sm:$0xff]
      %v352 = vld [vmem:[%s273 + $0xe0] sm:$0xff]
      %v353 = vld [vmem:[%s273 + $0xe8] sm:$0xff]
      %v354 = vld [vmem:[%s273 + $0xf0] sm:$0xff]
      %v355 = vld [vmem:[%s273 + $0xf8] sm:$0xff]
      %v357 = vlaneseq
      %v358 = vshrl.u32 %v357, 7
      %v359 = vsub.s32 0, %v358
      %v360 = vrot.slane %v323, %v359
      %vm362 = vcmask 31744
      %v364 = vsel %vm362, %v324, 0
      %v367 = vsel %vm362, %v325, 0
      %v370 = vsel %vm362, %v326, 0
      %v373 = vsel %vm362, %v327, 0
      %v376 = vsel %vm362, %v328, 0
      %v379 = vsel %vm362, %v329, 0
      %v382 = vsel %vm362, %v330, 0
      %v385 = vsel %vm362, %v331, 0
      %v388 = vsel %vm362, %v332, 0
      %v391 = vsel %vm362, %v333, 0
      %v394 = vsel %vm362, %v334, 0
      %v397 = vsel %vm362, %v335, 0
      %v400 = vsel %vm362, %v336, 0
      %v403 = vsel %vm362, %v337, 0
      %v406 = vsel %vm362, %v338, 0
      %v409 = vsel %vm362, %v339, 0
      %v412 = vsel %vm362, %v340, 0
      %v415 = vsel %vm362, %v341, 0
      %v418 = vsel %vm362, %v342, 0
      %v421 = vsel %vm362, %v343, 0
      %v424 = vsel %vm362, %v344, 0
      %v427 = vsel %vm362, %v345, 0
      %v430 = vsel %vm362, %v346, 0
      %v433 = vsel %vm362, %v347, 0
      %v436 = vsel %vm362, %v348, 0
      %v439 = vsel %vm362, %v349, 0
      %v442 = vsel %vm362, %v350, 0
      %v445 = vsel %vm362, %v351, 0
      %v448 = vsel %vm362, %v352, 0
      %v451 = vsel %vm362, %v353, 0
      %v454 = vsel %vm362, %v354, 0
      %v457 = vsel %vm362, %v355, 0
      %vm459 = vcmask 1043456
      %v461 = vsel %vm459, %v322, 0
      %463 = vmatprep.subr.mxu0 0.0
      %464 = vmatpush1.msra.mxu0 0.0
      %465 = vmatprep.subr.mxu0 0.0
      %466 = vmatpush1.msra.mxu0 0.0
      %467 = vmatprep.subr.mxu0 0.0
      %468 = vmatpush1.msra.mxu0 0.0
      %469 = vmatprep.subr.mxu0 0.0
      %470 = vmatpush1.msra.mxu0 0.0
      %471 = vmatprep.subr.mxu0 0.0
      %472 = vmatpush1.msra.mxu0 0.0
      %473 = vmatprep.subr.mxu0 0.0
      %474 = vmatpush1.msra.mxu0 0.0
      %475 = vmatprep.subr.mxu0 0.0
      %476 = vmatpush1.msra.mxu0 0.0
      %477 = vmatprep.subr.mxu0 0.0
      %478 = vmatpush1.msra.mxu0 0.0
      %479 = vmatprep.subr.mxu0 0.0
      %480 = vmatpush1.msra.mxu0 0.0
      %481 = vmatprep.subr.mxu0 0.0
      %482 = vmatpush1.msra.mxu0 0.0
      %483 = vmatprep.subr.mxu0 0.0
      %484 = vmatpush1.msra.mxu0 0.0
      %485 = vmatprep.subr.mxu0 0.0
      %486 = vmatpush1.msra.mxu0 0.0
      %487 = vmatprep.subr.mxu0 0.0
      %488 = vmatpush1.msra.mxu0 0.0
      %489 = vmatprep.subr.mxu0 0.0
      %490 = vmatpush1.msra.mxu0 0.0
      %491 = vmatprep.subr.mxu0 0.0
      %492 = vmatpush1.msra.mxu0 0.0
      %493 = vmatprep.subr.mxu0 0.0
      %494 = vmatpush1.msra.mxu0 %v461
      %495 = vmatprep.subr.mxu0 0.0
      %496 = vmatpush2.msra.mxu0 0.0
      %497 = vmatprep.subr.mxu0 0.0
      %498 = vmatpush2.msra.mxu0 0.0
      %499 = vmatprep.subr.mxu0 0.0
      %500 = vmatpush2.msra.mxu0 0.0
      %501 = vmatprep.subr.mxu0 0.0
      %502 = vmatpush2.msra.mxu0 0.0
      %503 = vmatprep.subr.mxu0 0.0
      %504 = vmatpush2.msra.mxu0 0.0
      %505 = vmatprep.subr.mxu0 0.0
      %506 = vmatpush2.msra.mxu0 0.0
      %507 = vmatprep.subr.mxu0 0.0
      %508 = vmatpush2.msra.mxu0 0.0
      %509 = vmatprep.subr.mxu0 0.0
      %510 = vmatpush2.msra.mxu0 0.0
      %511 = vmatprep.subr.mxu0 0.0
      %512 = vmatpush2.msra.mxu0 0.0
      %513 = vmatprep.subr.mxu0 0.0
      %514 = vmatpush2.msra.mxu0 0.0
      %515 = vmatprep.subr.mxu0 0.0
      %516 = vmatpush2.msra.mxu0 0.0
      %517 = vmatprep.subr.mxu0 0.0
      %518 = vmatpush2.msra.mxu0 0.0
      %519 = vmatprep.subr.mxu0 0.0
      %520 = vmatpush2.msra.mxu0 0.0
      %521 = vmatprep.subr.mxu0 0.0
      %522 = vmatpush2.msra.mxu0 0.0
      %523 = vmatprep.subr.mxu0 0.0
      %524 = vmatpush2.msra.mxu0 0.0
      %525 = vmatprep.subr.mxu0 0.0
      %526 = vmatpush2.msra.mxu0 0.0
      %527 = vmatprep.mubr.f32.mxu0 0.0
      %528 = vmatmul.mubr.f32.gmra.mxu0 %v364
      %v529 = vpop.f32.mrf.mxu0
      %v530 = vadd.f32 %v360, %v529
      %v531 = vpop.f32.mrf.mxu0
      %532 = vmatprep.mubr.f32.mxu0 0.0
      %533 = vmatmul.mubr.f32.gmra.mxu0 %v367
      %v534 = vpop.f32.mrf.mxu0
      %v535 = vadd.f32 %v360, %v534
      %v536 = vpop.f32.mrf.mxu0
      %537 = vmatprep.mubr.f32.mxu0 0.0
      %538 = vmatmul.mubr.f32.gmra.mxu0 %v370
      %v539 = vpop.f32.mrf.mxu0
      %v540 = vadd.f32 %v360, %v539
      %v541 = vpop.f32.mrf.mxu0
      %542 = vmatprep.mubr.f32.mxu0 0.0
      %543 = vmatmul.mubr.f32.gmra.mxu0 %v373
      %v544 = vpop.f32.mrf.mxu0
      %v545 = vadd.f32 %v360, %v544
      %v546 = vpop.f32.mrf.mxu0
      %547 = vmatprep.mubr.f32.mxu0 0.0
      %548 = vmatmul.mubr.f32.gmra.mxu0 %v376
      %v549 = vpop.f32.mrf.mxu0
      %v550 = vadd.f32 %v360, %v549
      %v551 = vpop.f32.mrf.mxu0
      %552 = vmatprep.mubr.f32.mxu0 0.0
      %553 = vmatmul.mubr.f32.gmra.mxu0 %v379
      %v554 = vpop.f32.mrf.mxu0
      %v555 = vadd.f32 %v360, %v554
      %v556 = vpop.f32.mrf.mxu0
      %557 = vmatprep.mubr.f32.mxu0 0.0
      %558 = vmatmul.mubr.f32.gmra.mxu0 %v382
      %v559 = vpop.f32.mrf.mxu0
      %v560 = vadd.f32 %v360, %v559
      %v561 = vpop.f32.mrf.mxu0
      %562 = vmatprep.mubr.f32.mxu0 0.0
      %563 = vmatmul.mubr.f32.gmra.mxu0 %v385
      %v564 = vpop.f32.mrf.mxu0
      %v565 = vadd.f32 %v360, %v564
      %v566 = vpop.f32.mrf.mxu0
      %567 = vmatprep.mubr.f32.mxu0 0.0
      %568 = vmatmul.mubr.f32.gmra.mxu0 %v388
      %v569 = vpop.f32.mrf.mxu0
      %v570 = vadd.f32 %v360, %v569
      %v571 = vpop.f32.mrf.mxu0
      %572 = vmatprep.mubr.f32.mxu0 0.0
      %573 = vmatmul.mubr.f32.gmra.mxu0 %v391
      %v574 = vpop.f32.mrf.mxu0
      %v575 = vadd.f32 %v360, %v574
      %v576 = vpop.f32.mrf.mxu0
      %577 = vmatprep.mubr.f32.mxu0 0.0
      %578 = vmatmul.mubr.f32.gmra.mxu0 %v394
      %v579 = vpop.f32.mrf.mxu0
      %v580 = vadd.f32 %v360, %v579
      %v581 = vpop.f32.mrf.mxu0
      %582 = vmatprep.mubr.f32.mxu0 0.0
      %583 = vmatmul.mubr.f32.gmra.mxu0 %v397
      %v584 = vpop.f32.mrf.mxu0
      %v585 = vadd.f32 %v360, %v584
      %v586 = vpop.f32.mrf.mxu0
      %587 = vmatprep.mubr.f32.mxu0 0.0
      %588 = vmatmul.mubr.f32.gmra.mxu0 %v400
      %v589 = vpop.f32.mrf.mxu0
      %v590 = vadd.f32 %v360, %v589
      %v591 = vpop.f32.mrf.mxu0
      %592 = vmatprep.mubr.f32.mxu0 0.0
      %593 = vmatmul.mubr.f32.gmra.mxu0 %v403
      %v594 = vpop.f32.mrf.mxu0
      %v595 = vadd.f32 %v360, %v594
      %v596 = vpop.f32.mrf.mxu0
      %597 = vmatprep.mubr.f32.mxu0 0.0
      %598 = vmatmul.mubr.f32.gmra.mxu0 %v406
      %v599 = vpop.f32.mrf.mxu0
      %v600 = vadd.f32 %v360, %v599
      %v601 = vpop.f32.mrf.mxu0
      %602 = vmatprep.mubr.f32.mxu0 0.0
      %603 = vmatmul.mubr.f32.gmra.mxu0 %v409
      %v604 = vpop.f32.mrf.mxu0
      %v605 = vadd.f32 %v360, %v604
      %v606 = vpop.f32.mrf.mxu0
      %607 = vmatprep.mubr.f32.mxu0 0.0
      %608 = vmatmul.mubr.f32.gmra.mxu0 %v412
      %v609 = vpop.f32.mrf.mxu0
      %v610 = vadd.f32 %v360, %v609
      %v611 = vpop.f32.mrf.mxu0
      %612 = vmatprep.mubr.f32.mxu0 0.0
      %613 = vmatmul.mubr.f32.gmra.mxu0 %v415
      %v614 = vpop.f32.mrf.mxu0
      %v615 = vadd.f32 %v360, %v614
      %v616 = vpop.f32.mrf.mxu0
      %617 = vmatprep.mubr.f32.mxu0 0.0
      %618 = vmatmul.mubr.f32.gmra.mxu0 %v418
      %v619 = vpop.f32.mrf.mxu0
      %v620 = vadd.f32 %v360, %v619
      %v621 = vpop.f32.mrf.mxu0
      %622 = vmatprep.mubr.f32.mxu0 0.0
      %623 = vmatmul.mubr.f32.gmra.mxu0 %v421
      %v624 = vpop.f32.mrf.mxu0
      %v625 = vadd.f32 %v360, %v624
      %v626 = vpop.f32.mrf.mxu0
      %627 = vmatprep.mubr.f32.mxu0 0.0
      %628 = vmatmul.mubr.f32.gmra.mxu0 %v424
      %v629 = vpop.f32.mrf.mxu0
      %v630 = vadd.f32 %v360, %v629
      %v631 = vpop.f32.mrf.mxu0
      %632 = vmatprep.mubr.f32.mxu0 0.0
      %633 = vmatmul.mubr.f32.gmra.mxu0 %v427
      %v634 = vpop.f32.mrf.mxu0
      %v635 = vadd.f32 %v360, %v634
      %v636 = vpop.f32.mrf.mxu0
      %637 = vmatprep.mubr.f32.mxu0 0.0
      %638 = vmatmul.mubr.f32.gmra.mxu0 %v430
      %v639 = vpop.f32.mrf.mxu0
      %v640 = vadd.f32 %v360, %v639
      %v641 = vpop.f32.mrf.mxu0
      %642 = vmatprep.mubr.f32.mxu0 0.0
      %643 = vmatmul.mubr.f32.gmra.mxu0 %v433
      %v644 = vpop.f32.mrf.mxu0
      %v645 = vadd.f32 %v360, %v644
      %v646 = vpop.f32.mrf.mxu0
      %647 = vmatprep.mubr.f32.mxu0 0.0
      %648 = vmatmul.mubr.f32.gmra.mxu0 %v436
      %v649 = vpop.f32.mrf.mxu0
      %v650 = vadd.f32 %v360, %v649
      %v651 = vpop.f32.mrf.mxu0
      %652 = vmatprep.mubr.f32.mxu0 0.0
      %653 = vmatmul.mubr.f32.gmra.mxu0 %v439
      %v654 = vpop.f32.mrf.mxu0
      %v655 = vadd.f32 %v360, %v654
      %v656 = vpop.f32.mrf.mxu0
      %657 = vmatprep.mubr.f32.mxu0 0.0
      %658 = vmatmul.mubr.f32.gmra.mxu0 %v442
      %v659 = vpop.f32.mrf.mxu0
      %v660 = vadd.f32 %v360, %v659
      %v661 = vpop.f32.mrf.mxu0
      %662 = vmatprep.mubr.f32.mxu0 0.0
      %663 = vmatmul.mubr.f32.gmra.mxu0 %v445
      %v664 = vpop.f32.mrf.mxu0
      %v665 = vadd.f32 %v360, %v664
      %v666 = vpop.f32.mrf.mxu0
      %667 = vmatprep.mubr.f32.mxu0 0.0
      %668 = vmatmul.mubr.f32.gmra.mxu0 %v448
      %v669 = vpop.f32.mrf.mxu0
      %v670 = vadd.f32 %v360, %v669
      %v671 = vpop.f32.mrf.mxu0
      %672 = vmatprep.mubr.f32.mxu0 0.0
      %673 = vmatmul.mubr.f32.gmra.mxu0 %v451
      %v674 = vpop.f32.mrf.mxu0
      %v675 = vadd.f32 %v360, %v674
      %v676 = vpop.f32.mrf.mxu0
      %677 = vmatprep.mubr.f32.mxu0 0.0
      %678 = vmatmul.mubr.f32.gmra.mxu0 %v454
      %v679 = vpop.f32.mrf.mxu0
      %v680 = vadd.f32 %v360, %v679
      %v681 = vpop.f32.mrf.mxu0
      %682 = vmatprep.mubr.f32.mxu0 0.0
      %683 = vmatmul.mubr.f32.gmra.mxu0 %v457
      %v684 = vpop.f32.mrf.mxu0
      %v685 = vadd.f32 %v360, %v684
      %v686 = vpop.f32.mrf.mxu0
      %687 = vdwg.mxu0
      %v688 = vmax.f32 %v530, 0.0
      %v689 = vmax.f32 %v535, 0.0
      %v690 = vmax.f32 %v540, 0.0
      %v691 = vmax.f32 %v545, 0.0
      %v692 = vmax.f32 %v550, 0.0
      %v693 = vmax.f32 %v555, 0.0
      %v694 = vmax.f32 %v560, 0.0
      %v695 = vmax.f32 %v565, 0.0
      %v696 = vmax.f32 %v570, 0.0
      %v697 = vmax.f32 %v575, 0.0
      %v698 = vmax.f32 %v580, 0.0
      %v699 = vmax.f32 %v585, 0.0
      %v700 = vmax.f32 %v590, 0.0
      %v701 = vmax.f32 %v595, 0.0
      %v702 = vmax.f32 %v600, 0.0
      %v703 = vmax.f32 %v605, 0.0
      %v704 = vmax.f32 %v610, 0.0
      %v705 = vmax.f32 %v615, 0.0
      %v706 = vmax.f32 %v620, 0.0
      %v707 = vmax.f32 %v625, 0.0
      %v708 = vmax.f32 %v630, 0.0
      %v709 = vmax.f32 %v635, 0.0
      %v710 = vmax.f32 %v640, 0.0
      %v711 = vmax.f32 %v645, 0.0
      %v712 = vmax.f32 %v650, 0.0
      %v713 = vmax.f32 %v655, 0.0
      %v714 = vmax.f32 %v660, 0.0
      %v715 = vmax.f32 %v665, 0.0
      %v716 = vmax.f32 %v670, 0.0
      %v717 = vmax.f32 %v675, 0.0
      %v718 = vmax.f32 %v680, 0.0
      %v719 = vmax.f32 %v685, 0.0
      %v720 = vmin.f32 %v688, 6.0
      %v721 = vmin.f32 %v689, 6.0
      %v722 = vmin.f32 %v690, 6.0
      %v723 = vmin.f32 %v691, 6.0
      %v724 = vmin.f32 %v692, 6.0
      %v725 = vmin.f32 %v693, 6.0
      %v726 = vmin.f32 %v694, 6.0
      %v727 = vmin.f32 %v695, 6.0
      %v728 = vmin.f32 %v696, 6.0
      %v729 = vmin.f32 %v697, 6.0
      %v730 = vmin.f32 %v698, 6.0
      %v731 = vmin.f32 %v699, 6.0
      %v732 = vmin.f32 %v700, 6.0
      %v733 = vmin.f32 %v701, 6.0
      %v734 = vmin.f32 %v702, 6.0
      %v735 = vmin.f32 %v703, 6.0
      %v736 = vmin.f32 %v704, 6.0
      %v737 = vmin.f32 %v705, 6.0
      %v738 = vmin.f32 %v706, 6.0
      %v739 = vmin.f32 %v707, 6.0
      %v740 = vmin.f32 %v708, 6.0
      %v741 = vmin.f32 %v709, 6.0
      %v742 = vmin.f32 %v710, 6.0
      %v743 = vmin.f32 %v711, 6.0
      %v744 = vmin.f32 %v712, 6.0
      %v745 = vmin.f32 %v713, 6.0
      %v746 = vmin.f32 %v714, 6.0
      %v747 = vmin.f32 %v715, 6.0
      %v748 = vmin.f32 %v716, 6.0
      %v749 = vmin.f32 %v717, 6.0
      %v750 = vmin.f32 %v718, 6.0
      %v751 = vmin.f32 %v719, 6.0
      %752 = vst.msk [vmem:[%s289 + $0x8] sm:$0xff] %vm279, %v720
      %753 = vst.msk [vmem:[%s289 + $0x10] sm:$0xff] %vm279, %v721
      %754 = vst.msk [vmem:[%s289 + $0x28] sm:$0xff] %vm279, %v722
      %755 = vst.msk [vmem:[%s289 + $0x30] sm:$0xff] %vm279, %v723
      %756 = vst.msk [vmem:[%s289 + $0x48] sm:$0xff] %vm279, %v724
      %757 = vst.msk [vmem:[%s289 + $0x50] sm:$0xff] %vm279, %v725
      %758 = vst.msk [vmem:[%s289 + $0x68] sm:$0xff] %vm279, %v726
      %759 = vst.msk [vmem:[%s289 + $0x70] sm:$0xff] %vm279, %v727
      %760 = vst.msk [vmem:[%s289 + $0x88] sm:$0xff] %vm279, %v728
      %761 = vst.msk [vmem:[%s289 + $0x90] sm:$0xff] %vm279, %v729
      %762 = vst.msk [vmem:[%s289 + $0xa8] sm:$0xff] %vm279, %v730
      %763 = vst.msk [vmem:[%s289 + $0xb0] sm:$0xff] %vm279, %v731
      %764 = vst.msk [vmem:[%s289 + $0xc8] sm:$0xff] %vm279, %v732
      %765 = vst.msk [vmem:[%s289 + $0xd0] sm:$0xff] %vm279, %v733
      %766 = vst.msk [vmem:[%s289 + $0xe8] sm:$0xff] %vm279, %v734
      %767 = vst.msk [vmem:[%s289 + $0xf0] sm:$0xff] %vm279, %v735
      %768 = vst.msk [vmem:[%s289 + $0x108] sm:$0xff] %vm279, %v736
      %769 = vst.msk [vmem:[%s289 + $0x110] sm:$0xff] %vm279, %v737
      %770 = vst.msk [vmem:[%s289 + $0x128] sm:$0xff] %vm279, %v738
      %771 = vst.msk [vmem:[%s289 + $0x130] sm:$0xff] %vm279, %v739
      %772 = vst.msk [vmem:[%s289 + $0x148] sm:$0xff] %vm279, %v740
      %773 = vst.msk [vmem:[%s289 + $0x150] sm:$0xff] %vm279, %v741
      %774 = vst.msk [vmem:[%s289 + $0x168] sm:$0xff] %vm279, %v742
      %775 = vst.msk [vmem:[%s289 + $0x170] sm:$0xff] %vm279, %v743
      %776 = vst.msk [vmem:[%s289 + $0x188] sm:$0xff] %vm279, %v744
      %777 = vst.msk [vmem:[%s289 + $0x190] sm:$0xff] %vm279, %v745
      %778 = vst.msk [vmem:[%s289 + $0x1a8] sm:$0xff] %vm279, %v746
      %779 = vst.msk [vmem:[%s289 + $0x1b0] sm:$0xff] %vm279, %v747
      %780 = vst.msk [vmem:[%s289 + $0x1c8] sm:$0xff] %vm279, %v748
      %781 = vst.msk [vmem:[%s289 + $0x1d0] sm:$0xff] %vm279, %v749
      %782 = vst.msk [vmem:[%s289 + $0x1e8] sm:$0xff] %vm279, %v750
      %783 = vst.msk [vmem:[%s289 + $0x1f0] sm:$0xff] %vm279, %v751
      %v784 = vld [vmem:[%s3] sm:$0xff]
      %v785 = vld [vmem:[%s3 + $0x8] sm:$0x1]
      %v786 = vld [vmem:[%s4] sm:$0x1]
      %v787 = vld [vmem:[%s5] sm:$0xff]
      %v788 = vld [vmem:[%s5 + $0x8] sm:$0xff]
      %v789 = vld [vmem:[%s6] sm:$0x1]
      %s790 = smul.u32 0, 32
      %s791 = scalar_lea.vmem [#allocation2], %s790
      %v792 = vld [vmem:[%s791 + $0x7] sm:$0xff]
      %v793 = vld [vmem:[%s791 + $0xf] sm:$0xff]
      %v794 = vld [vmem:[%s791 + $0x27] sm:$0xff]
      %v795 = vld [vmem:[%s791 + $0x2f] sm:$0xff]
      %v796 = vld [vmem:[%s791 + $0x47] sm:$0xff]
      %v797 = vld [vmem:[%s791 + $0x4f] sm:$0xff]
      %v798 = vld [vmem:[%s791 + $0x67] sm:$0xff]
      %v799 = vld [vmem:[%s791 + $0x6f] sm:$0xff]
      %v800 = vld [vmem:[%s791 + $0x87] sm:$0xff]
      %v801 = vld [vmem:[%s791 + $0x8f] sm:$0xff]
      %v802 = vld [vmem:[%s791 + $0xa7] sm:$0xff]
      %v803 = vld [vmem:[%s791 + $0xaf] sm:$0xff]
      %v804 = vld [vmem:[%s791 + $0xc7] sm:$0xff]
      %v805 = vld [vmem:[%s791 + $0xcf] sm:$0xff]
      %v806 = vld [vmem:[%s791 + $0xe7] sm:$0xff]
      %v807 = vld [vmem:[%s791 + $0xef] sm:$0xff]
      %v808 = vlaneseq
      %v809 = vshrl.u32 %v808, 7
      %v810 = vsub.s32 0, %v809
      %v811 = vrot.slane %v784, %v810
      %v812 = vmul.f32 %v792, %v811
      %v813 = vmul.f32 %v793, %v811
      %v814 = vmul.f32 %v794, %v811
      %v815 = vmul.f32 %v795, %v811
      %v816 = vmul.f32 %v796, %v811
      %v817 = vmul.f32 %v797, %v811
      %v818 = vmul.f32 %v798, %v811
      %v819 = vmul.f32 %v799, %v811
      %v820 = vmul.f32 %v800, %v811
      %v821 = vmul.f32 %v801, %v811
      %v822 = vmul.f32 %v802, %v811
      %v823 = vmul.f32 %v803, %v811
      %v824 = vmul.f32 %v804, %v811
      %v825 = vmul.f32 %v805, %v811
      %v826 = vmul.f32 %v806, %v811
      %v827 = vmul.f32 %v807, %v811
      %v828 = vld [vmem:[%s791 + $0x8] sm:$0xff]
      %v829 = vld [vmem:[%s791 + $0x10] sm:$0xff]
      %v830 = vld [vmem:[%s791 + $0x28] sm:$0xff]
      %v831 = vld [vmem:[%s791 + $0x30] sm:$0xff]
      %v832 = vld [vmem:[%s791 + $0x48] sm:$0xff]
      %v833 = vld [vmem:[%s791 + $0x50] sm:$0xff]
      %v834 = vld [vmem:[%s791 + $0x68] sm:$0xff]
      %v835 = vld [vmem:[%s791 + $0x70] sm:$0xff]
      %v836 = vld [vmem:[%s791 + $0x88] sm:$0xff]
      %v837 = vld [vmem:[%s791 + $0x90] sm:$0xff]
      %v838 = vld [vmem:[%s791 + $0xa8] sm:$0xff]
      %v839 = vld [vmem:[%s791 + $0xb0] sm:$0xff]
      %v840 = vld [vmem:[%s791 + $0xc8] sm:$0xff]
      %v841 = vld [vmem:[%s791 + $0xd0] sm:$0xff]
      %v842 = vld [vmem:[%s791 + $0xe8] sm:$0xff]
      %v843 = vld [vmem:[%s791 + $0xf0] sm:$0xff]
      %v844 = vlaneseq
      %v845 = vshrl.u32 %v844, 7
      %v846 = vsub.s32 1, %v845
      %v847 = vrot.slane %v784, %v846
      %v848 = vmul.f32 %v828, %v847
      %v849 = vmul.f32 %v829, %v847
      %v850 = vmul.f32 %v830, %v847
      %v851 = vmul.f32 %v831, %v847
      %v852 = vmul.f32 %v832, %v847
      %v853 = vmul.f32 %v833, %v847
      %v854 = vmul.f32 %v834, %v847
      %v855 = vmul.f32 %v835, %v847
      %v856 = vmul.f32 %v836, %v847
      %v857 = vmul.f32 %v837, %v847
      %v858 = vmul.f32 %v838, %v847
      %v859 = vmul.f32 %v839, %v847
      %v860 = vmul.f32 %v840, %v847
      %v861 = vmul.f32 %v841, %v847
      %v862 = vmul.f32 %v842, %v847
      %v863 = vmul.f32 %v843, %v847
      %v864 = vadd.f32 %v812, %v848
      %v865 = vadd.f32 %v813, %v849
      %v866 = vadd.f32 %v814, %v850
      %v867 = vadd.f32 %v815, %v851
      %v868 = vadd.f32 %v816, %v852
      %v869 = vadd.f32 %v817, %v853
      %v870 = vadd.f32 %v818, %v854
      %v871 = vadd.f32 %v819, %v855
      %v872 = vadd.f32 %v820, %v856
      %v873 = vadd.f32 %v821, %v857
      %v874 = vadd.f32 %v822, %v858
      %v875 = vadd.f32 %v823, %v859
      %v876 = vadd.f32 %v824, %v860
      %v877 = vadd.f32 %v825, %v861
      %v878 = vadd.f32 %v826, %v862
      %v879 = vadd.f32 %v827, %v863
      %v880 = vld [vmem:[%s791 + $0x9] sm:$0xff]
      %v881 = vld [vmem:[%s791 + $0x11] sm:$0xff]
      %v882 = vld [vmem:[%s791 + $0x29] sm:$0xff]
      %v883 = vld [vmem:[%s791 + $0x31] sm:$0xff]
      %v884 = vld [vmem:[%s791 + $0x49] sm:$0xff]
      %v885 = vld [vmem:[%s791 + $0x51] sm:$0xff]
      %v886 = vld [vmem:[%s791 + $0x69] sm:$0xff]
      %v887 = vld [vmem:[%s791 + $0x71] sm:$0xff]
      %v888 = vld [vmem:[%s791 + $0x89] sm:$0xff]
      %v889 = vld [vmem:[%s791 + $0x91] sm:$0xff]
      %v890 = vld [vmem:[%s791 + $0xa9] sm:$0xff]
      %v891 = vld [vmem:[%s791 + $0xb1] sm:$0xff]
      %v892 = vld [vmem:[%s791 + $0xc9] sm:$0xff]
      %v893 = vld [vmem:[%s791 + $0xd1] sm:$0xff]
      %v894 = vld [vmem:[%s791 + $0xe9] sm:$0xff]
      %v895 = vld [vmem:[%s791 + $0xf1] sm:$0xff]
      %v896 = vlaneseq
      %v897 = vshrl.u32 %v896, 7
      %v898 = vsub.s32 2, %v897
      %v899 = vrot.slane %v784, %v898
      %v900 = vmul.f32 %v880, %v899
      %v901 = vmul.f32 %v881, %v899
      %v902 = vmul.f32 %v882, %v899
      %v903 = vmul.f32 %v883, %v899
      %v904 = vmul.f32 %v884, %v899
      %v905 = vmul.f32 %v885, %v899
      %v906 = vmul.f32 %v886, %v899
      %v907 = vmul.f32 %v887, %v899
      %v908 = vmul.f32 %v888, %v899
      %v909 = vmul.f32 %v889, %v899
      %v910 = vmul.f32 %v890, %v899
      %v911 = vmul.f32 %v891, %v899
      %v912 = vmul.f32 %v892, %v899
      %v913 = vmul.f32 %v893, %v899
      %v914 = vmul.f32 %v894, %v899
      %v915 = vmul.f32 %v895, %v899
      %v916 = vadd.f32 %v864, %v900
      %v917 = vadd.f32 %v865, %v901
      %v918 = vadd.f32 %v866, %v902
      %v919 = vadd.f32 %v867, %v903
      %v920 = vadd.f32 %v868, %v904
      %v921 = vadd.f32 %v869, %v905
      %v922 = vadd.f32 %v870, %v906
      %v923 = vadd.f32 %v871, %v907
      %v924 = vadd.f32 %v872, %v908
      %v925 = vadd.f32 %v873, %v909
      %v926 = vadd.f32 %v874, %v910
      %v927 = vadd.f32 %v875, %v911
      %v928 = vadd.f32 %v876, %v912
      %v929 = vadd.f32 %v877, %v913
      %v930 = vadd.f32 %v878, %v914
      %v931 = vadd.f32 %v879, %v915
      %s932 = sadd.s32 0, 1
      %s933 = smul.u32 %s932, 32
      %s934 = scalar_lea.vmem [#allocation2], %s933
      %v935 = vld [vmem:[%s934 + $0x7] sm:$0xff]
      %v936 = vld [vmem:[%s934 + $0xf] sm:$0xff]
      %v937 = vld [vmem:[%s934 + $0x27] sm:$0xff]
      %v938 = vld [vmem:[%s934 + $0x2f] sm:$0xff]
      %v939 = vld [vmem:[%s934 + $0x47] sm:$0xff]
      %v940 = vld [vmem:[%s934 + $0x4f] sm:$0xff]
      %v941 = vld [vmem:[%s934 + $0x67] sm:$0xff]
      %v942 = vld [vmem:[%s934 + $0x6f] sm:$0xff]
      %v943 = vld [vmem:[%s934 + $0x87] sm:$0xff]
      %v944 = vld [vmem:[%s934 + $0x8f] sm:$0xff]
      %v945 = vld [vmem:[%s934 + $0xa7] sm:$0xff]
      %v946 = vld [vmem:[%s934 + $0xaf] sm:$0xff]
      %v947 = vld [vmem:[%s934 + $0xc7] sm:$0xff]
      %v948 = vld [vmem:[%s934 + $0xcf] sm:$0xff]
      %v949 = vld [vmem:[%s934 + $0xe7] sm:$0xff]
      %v950 = vld [vmem:[%s934 + $0xef] sm:$0xff]
      %v951 = vlaneseq
      %v952 = vshrl.u32 %v951, 7
      %v953 = vsub.s32 3, %v952
      %v954 = vrot.slane %v784, %v953
      %v955 = vmul.f32 %v935, %v954
      %v956 = vmul.f32 %v936, %v954
      %v957 = vmul.f32 %v937, %v954
      %v958 = vmul.f32 %v938, %v954
      %v959 = vmul.f32 %v939, %v954
      %v960 = vmul.f32 %v940, %v954
      %v961 = vmul.f32 %v941, %v954
      %v962 = vmul.f32 %v942, %v954
      %v963 = vmul.f32 %v943, %v954
      %v964 = vmul.f32 %v944, %v954
      %v965 = vmul.f32 %v945, %v954
      %v966 = vmul.f32 %v946, %v954
      %v967 = vmul.f32 %v947, %v954
      %v968 = vmul.f32 %v948, %v954
      %v969 = vmul.f32 %v949, %v954
      %v970 = vmul.f32 %v950, %v954
      %v971 = vadd.f32 %v916, %v955
      %v972 = vadd.f32 %v917, %v956
      %v973 = vadd.f32 %v918, %v957
      %v974 = vadd.f32 %v919, %v958
      %v975 = vadd.f32 %v920, %v959
      %v976 = vadd.f32 %v921, %v960
      %v977 = vadd.f32 %v922, %v961
      %v978 = vadd.f32 %v923, %v962
      %v979 = vadd.f32 %v924, %v963
      %v980 = vadd.f32 %v925, %v964
      %v981 = vadd.f32 %v926, %v965
      %v982 = vadd.f32 %v927, %v966
      %v983 = vadd.f32 %v928, %v967
      %v984 = vadd.f32 %v929, %v968
      %v985 = vadd.f32 %v930, %v969
      %v986 = vadd.f32 %v931, %v970
      %v987 = vld [vmem:[%s934 + $0x8] sm:$0xff]
      %v988 = vld [vmem:[%s934 + $0x10] sm:$0xff]
      %v989 = vld [vmem:[%s934 + $0x28] sm:$0xff]
      %v990 = vld [vmem:[%s934 + $0x30] sm:$0xff]
      %v991 = vld [vmem:[%s934 + $0x48] sm:$0xff]
      %v992 = vld [vmem:[%s934 + $0x50] sm:$0xff]
      %v993 = vld [vmem:[%s934 + $0x68] sm:$0xff]
      %v994 = vld [vmem:[%s934 + $0x70] sm:$0xff]
      %v995 = vld [vmem:[%s934 + $0x88] sm:$0xff]
      %v996 = vld [vmem:[%s934 + $0x90] sm:$0xff]
      %v997 = vld [vmem:[%s934 + $0xa8] sm:$0xff]
      %v998 = vld [vmem:[%s934 + $0xb0] sm:$0xff]
      %v999 = vld [vmem:[%s934 + $0xc8] sm:$0xff]
      %v1000 = vld [vmem:[%s934 + $0xd0] sm:$0xff]
      %v1001 = vld [vmem:[%s934 + $0xe8] sm:$0xff]
      %v1002 = vld [vmem:[%s934 + $0xf0] sm:$0xff]
      %v1003 = vlaneseq
      %v1004 = vshrl.u32 %v1003, 7
      %v1005 = vsub.s32 4, %v1004
      %v1006 = vrot.slane %v784, %v1005
      %v1007 = vmul.f32 %v987, %v1006
      %v1008 = vmul.f32 %v988, %v1006
      %v1009 = vmul.f32 %v989, %v1006
      %v1010 = vmul.f32 %v990, %v1006
      %v1011 = vmul.f32 %v991, %v1006
      %v1012 = vmul.f32 %v992, %v1006
      %v1013 = vmul.f32 %v993, %v1006
      %v1014 = vmul.f32 %v994, %v1006
      %v1015 = vmul.f32 %v995, %v1006
      %v1016 = vmul.f32 %v996, %v1006
      %v1017 = vmul.f32 %v997, %v1006
      %v1018 = vmul.f32 %v998, %v1006
      %v1019 = vmul.f32 %v999, %v1006
      %v1020 = vmul.f32 %v1000, %v1006
      %v1021 = vmul.f32 %v1001, %v1006
      %v1022 = vmul.f32 %v1002, %v1006
      %v1023 = vadd.f32 %v971, %v1007
      %v1024 = vadd.f32 %v972, %v1008
      %v1025 = vadd.f32 %v973, %v1009
      %v1026 = vadd.f32 %v974, %v1010
      %v1027 = vadd.f32 %v975, %v1011
      %v1028 = vadd.f32 %v976, %v1012
      %v1029 = vadd.f32 %v977, %v1013
      %v1030 = vadd.f32 %v978, %v1014
      %v1031 = vadd.f32 %v979, %v1015
      %v1032 = vadd.f32 %v980, %v1016
      %v1033 = vadd.f32 %v981, %v1017
      %v1034 = vadd.f32 %v982, %v1018
      %v1035 = vadd.f32 %v983, %v1019
      %v1036 = vadd.f32 %v984, %v1020
      %v1037 = vadd.f32 %v985, %v1021
      %v1038 = vadd.f32 %v986, %v1022
      %v1039 = vld [vmem:[%s934 + $0x9] sm:$0xff]
      %v1040 = vld [vmem:[%s934 + $0x11] sm:$0xff]
      %v1041 = vld [vmem:[%s934 + $0x29] sm:$0xff]
      %v1042 = vld [vmem:[%s934 + $0x31] sm:$0xff]
      %v1043 = vld [vmem:[%s934 + $0x49] sm:$0xff]
      %v1044 = vld [vmem:[%s934 + $0x51] sm:$0xff]
      %v1045 = vld [vmem:[%s934 + $0x69] sm:$0xff]
      %v1046 = vld [vmem:[%s934 + $0x71] sm:$0xff]
      %v1047 = vld [vmem:[%s934 + $0x89] sm:$0xff]
      %v1048 = vld [vmem:[%s934 + $0x91] sm:$0xff]
      %v1049 = vld [vmem:[%s934 + $0xa9] sm:$0xff]
      %v1050 = vld [vmem:[%s934 + $0xb1] sm:$0xff]
      %v1051 = vld [vmem:[%s934 + $0xc9] sm:$0xff]
      %v1052 = vld [vmem:[%s934 + $0xd1] sm:$0xff]
      %v1053 = vld [vmem:[%s934 + $0xe9] sm:$0xff]
      %v1054 = vld [vmem:[%s934 + $0xf1] sm:$0xff]
      %v1055 = vlaneseq
      %v1056 = vshrl.u32 %v1055, 7
      %v1057 = vsub.s32 5, %v1056
      %v1058 = vrot.slane %v784, %v1057
      %v1059 = vmul.f32 %v1039, %v1058
      %v1060 = vmul.f32 %v1040, %v1058
      %v1061 = vmul.f32 %v1041, %v1058
      %v1062 = vmul.f32 %v1042, %v1058
      %v1063 = vmul.f32 %v1043, %v1058
      %v1064 = vmul.f32 %v1044, %v1058
      %v1065 = vmul.f32 %v1045, %v1058
      %v1066 = vmul.f32 %v1046, %v1058
      %v1067 = vmul.f32 %v1047, %v1058
      %v1068 = vmul.f32 %v1048, %v1058
      %v1069 = vmul.f32 %v1049, %v1058
      %v1070 = vmul.f32 %v1050, %v1058
      %v1071 = vmul.f32 %v1051, %v1058
      %v1072 = vmul.f32 %v1052, %v1058
      %v1073 = vmul.f32 %v1053, %v1058
      %v1074 = vmul.f32 %v1054, %v1058
      %v1075 = vadd.f32 %v1023, %v1059
      %v1076 = vadd.f32 %v1024, %v1060
      %v1077 = vadd.f32 %v1025, %v1061
      %v1078 = vadd.f32 %v1026, %v1062
      %v1079 = vadd.f32 %v1027, %v1063
      %v1080 = vadd.f32 %v1028, %v1064
      %v1081 = vadd.f32 %v1029, %v1065
      %v1082 = vadd.f32 %v1030, %v1066
      %v1083 = vadd.f32 %v1031, %v1067
      %v1084 = vadd.f32 %v1032, %v1068
      %v1085 = vadd.f32 %v1033, %v1069
      %v1086 = vadd.f32 %v1034, %v1070
      %v1087 = vadd.f32 %v1035, %v1071
      %v1088 = vadd.f32 %v1036, %v1072
      %v1089 = vadd.f32 %v1037, %v1073
      %v1090 = vadd.f32 %v1038, %v1074
      %s1091 = sadd.s32 0, 2
      %s1092 = smul.u32 %s1091, 32
      %s1093 = scalar_lea.vmem [#allocation2], %s1092
      %v1094 = vld [vmem:[%s1093 + $0x7] sm:$0xff]
      %v1095 = vld [vmem:[%s1093 + $0xf] sm:$0xff]
      %v1096 = vld [vmem:[%s1093 + $0x27] sm:$0xff]
      %v1097 = vld [vmem:[%s1093 + $0x2f] sm:$0xff]
      %v1098 = vld [vmem:[%s1093 + $0x47] sm:$0xff]
      %v1099 = vld [vmem:[%s1093 + $0x4f] sm:$0xff]
      %v1100 = vld [vmem:[%s1093 + $0x67] sm:$0xff]
      %v1101 = vld [vmem:[%s1093 + $0x6f] sm:$0xff]
      %v1102 = vld [vmem:[%s1093 + $0x87] sm:$0xff]
      %v1103 = vld [vmem:[%s1093 + $0x8f] sm:$0xff]
      %v1104 = vld [vmem:[%s1093 + $0xa7] sm:$0xff]
      %v1105 = vld [vmem:[%s1093 + $0xaf] sm:$0xff]
      %v1106 = vld [vmem:[%s1093 + $0xc7] sm:$0xff]
      %v1107 = vld [vmem:[%s1093 + $0xcf] sm:$0xff]
      %v1108 = vld [vmem:[%s1093 + $0xe7] sm:$0xff]
      %v1109 = vld [vmem:[%s1093 + $0xef] sm:$0xff]
      %v1110 = vlaneseq
      %v1111 = vshrl.u32 %v1110, 7
      %v1112 = vsub.s32 6, %v1111
      %v1113 = vrot.slane %v784, %v1112
      %v1114 = vmul.f32 %v1094, %v1113
      %v1115 = vmul.f32 %v1095, %v1113
      %v1116 = vmul.f32 %v1096, %v1113
      %v1117 = vmul.f32 %v1097, %v1113
      %v1118 = vmul.f32 %v1098, %v1113
      %v1119 = vmul.f32 %v1099, %v1113
      %v1120 = vmul.f32 %v1100, %v1113
      %v1121 = vmul.f32 %v1101, %v1113
      %v1122 = vmul.f32 %v1102, %v1113
      %v1123 = vmul.f32 %v1103, %v1113
      %v1124 = vmul.f32 %v1104, %v1113
      %v1125 = vmul.f32 %v1105, %v1113
      %v1126 = vmul.f32 %v1106, %v1113
      %v1127 = vmul.f32 %v1107, %v1113
      %v1128 = vmul.f32 %v1108, %v1113
      %v1129 = vmul.f32 %v1109, %v1113
      %v1130 = vadd.f32 %v1075, %v1114
      %v1131 = vadd.f32 %v1076, %v1115
      %v1132 = vadd.f32 %v1077, %v1116
      %v1133 = vadd.f32 %v1078, %v1117
      %v1134 = vadd.f32 %v1079, %v1118
      %v1135 = vadd.f32 %v1080, %v1119
      %v1136 = vadd.f32 %v1081, %v1120
      %v1137 = vadd.f32 %v1082, %v1121
      %v1138 = vadd.f32 %v1083, %v1122
      %v1139 = vadd.f32 %v1084, %v1123
      %v1140 = vadd.f32 %v1085, %v1124
      %v1141 = vadd.f32 %v1086, %v1125
      %v1142 = vadd.f32 %v1087, %v1126
      %v1143 = vadd.f32 %v1088, %v1127
      %v1144 = vadd.f32 %v1089, %v1128
      %v1145 = vadd.f32 %v1090, %v1129
      %v1146 = vld [vmem:[%s1093 + $0x8] sm:$0xff]
      %v1147 = vld [vmem:[%s1093 + $0x10] sm:$0xff]
      %v1148 = vld [vmem:[%s1093 + $0x28] sm:$0xff]
      %v1149 = vld [vmem:[%s1093 + $0x30] sm:$0xff]
      %v1150 = vld [vmem:[%s1093 + $0x48] sm:$0xff]
      %v1151 = vld [vmem:[%s1093 + $0x50] sm:$0xff]
      %v1152 = vld [vmem:[%s1093 + $0x68] sm:$0xff]
      %v1153 = vld [vmem:[%s1093 + $0x70] sm:$0xff]
      %v1154 = vld [vmem:[%s1093 + $0x88] sm:$0xff]
      %v1155 = vld [vmem:[%s1093 + $0x90] sm:$0xff]
      %v1156 = vld [vmem:[%s1093 + $0xa8] sm:$0xff]
      %v1157 = vld [vmem:[%s1093 + $0xb0] sm:$0xff]
      %v1158 = vld [vmem:[%s1093 + $0xc8] sm:$0xff]
      %v1159 = vld [vmem:[%s1093 + $0xd0] sm:$0xff]
      %v1160 = vld [vmem:[%s1093 + $0xe8] sm:$0xff]
      %v1161 = vld [vmem:[%s1093 + $0xf0] sm:$0xff]
      %v1162 = vlaneseq
      %v1163 = vshrl.u32 %v1162, 7
      %v1164 = vsub.s32 7, %v1163
      %v1165 = vrot.slane %v784, %v1164
      %v1166 = vmul.f32 %v1146, %v1165
      %v1167 = vmul.f32 %v1147, %v1165
      %v1168 = vmul.f32 %v1148, %v1165
      %v1169 = vmul.f32 %v1149, %v1165
      %v1170 = vmul.f32 %v1150, %v1165
      %v1171 = vmul.f32 %v1151, %v1165
      %v1172 = vmul.f32 %v1152, %v1165
      %v1173 = vmul.f32 %v1153, %v1165
      %v1174 = vmul.f32 %v1154, %v1165
      %v1175 = vmul.f32 %v1155, %v1165
      %v1176 = vmul.f32 %v1156, %v1165
      %v1177 = vmul.f32 %v1157, %v1165
      %v1178 = vmul.f32 %v1158, %v1165
      %v1179 = vmul.f32 %v1159, %v1165
      %v1180 = vmul.f32 %v1160, %v1165
      %v1181 = vmul.f32 %v1161, %v1165
      %v1182 = vadd.f32 %v1130, %v1166
      %v1183 = vadd.f32 %v1131, %v1167
      %v1184 = vadd.f32 %v1132, %v1168
      %v1185 = vadd.f32 %v1133, %v1169
      %v1186 = vadd.f32 %v1134, %v1170
      %v1187 = vadd.f32 %v1135, %v1171
      %v1188 = vadd.f32 %v1136, %v1172
      %v1189 = vadd.f32 %v1137, %v1173
      %v1190 = vadd.f32 %v1138, %v1174
      %v1191 = vadd.f32 %v1139, %v1175
      %v1192 = vadd.f32 %v1140, %v1176
      %v1193 = vadd.f32 %v1141, %v1177
      %v1194 = vadd.f32 %v1142, %v1178
      %v1195 = vadd.f32 %v1143, %v1179
      %v1196 = vadd.f32 %v1144, %v1180
      %v1197 = vadd.f32 %v1145, %v1181
      %v1198 = vld [vmem:[%s1093 + $0x9] sm:$0xff]
      %v1199 = vld [vmem:[%s1093 + $0x11] sm:$0xff]
      %v1200 = vld [vmem:[%s1093 + $0x29] sm:$0xff]
      %v1201 = vld [vmem:[%s1093 + $0x31] sm:$0xff]
      %v1202 = vld [vmem:[%s1093 + $0x49] sm:$0xff]
      %v1203 = vld [vmem:[%s1093 + $0x51] sm:$0xff]
      %v1204 = vld [vmem:[%s1093 + $0x69] sm:$0xff]
      %v1205 = vld [vmem:[%s1093 + $0x71] sm:$0xff]
      %v1206 = vld [vmem:[%s1093 + $0x89] sm:$0xff]
      %v1207 = vld [vmem:[%s1093 + $0x91] sm:$0xff]
      %v1208 = vld [vmem:[%s1093 + $0xa9] sm:$0xff]
      %v1209 = vld [vmem:[%s1093 + $0xb1] sm:$0xff]
      %v1210 = vld [vmem:[%s1093 + $0xc9] sm:$0xff]
      %v1211 = vld [vmem:[%s1093 + $0xd1] sm:$0xff]
      %v1212 = vld [vmem:[%s1093 + $0xe9] sm:$0xff]
      %v1213 = vld [vmem:[%s1093 + $0xf1] sm:$0xff]
      %v1214 = vlaneseq
      %v1215 = vshrl.u32 %v1214, 7
      %v1216 = vsub.s32 0, %v1215
      %v1217 = vrot.slane %v785, %v1216
      %v1218 = vmul.f32 %v1198, %v1217
      %v1219 = vmul.f32 %v1199, %v1217
      %v1220 = vmul.f32 %v1200, %v1217
      %v1221 = vmul.f32 %v1201, %v1217
      %v1222 = vmul.f32 %v1202, %v1217
      %v1223 = vmul.f32 %v1203, %v1217
      %v1224 = vmul.f32 %v1204, %v1217
      %v1225 = vmul.f32 %v1205, %v1217
      %v1226 = vmul.f32 %v1206, %v1217
      %v1227 = vmul.f32 %v1207, %v1217
      %v1228 = vmul.f32 %v1208, %v1217
      %v1229 = vmul.f32 %v1209, %v1217
      %v1230 = vmul.f32 %v1210, %v1217
      %v1231 = vmul.f32 %v1211, %v1217
      %v1232 = vmul.f32 %v1212, %v1217
      %v1233 = vmul.f32 %v1213, %v1217
      %v1234 = vadd.f32 %v1182, %v1218
      %v1235 = vadd.f32 %v1183, %v1219
      %v1236 = vadd.f32 %v1184, %v1220
      %v1237 = vadd.f32 %v1185, %v1221
      %v1238 = vadd.f32 %v1186, %v1222
      %v1239 = vadd.f32 %v1187, %v1223
      %v1240 = vadd.f32 %v1188, %v1224
      %v1241 = vadd.f32 %v1189, %v1225
      %v1242 = vadd.f32 %v1190, %v1226
      %v1243 = vadd.f32 %v1191, %v1227
      %v1244 = vadd.f32 %v1192, %v1228
      %v1245 = vadd.f32 %v1193, %v1229
      %v1246 = vadd.f32 %v1194, %v1230
      %v1247 = vadd.f32 %v1195, %v1231
      %v1248 = vadd.f32 %v1196, %v1232
      %v1249 = vadd.f32 %v1197, %v1233
      %v1251 = vlaneseq
      %v1252 = vshrl.u32 %v1251, 7
      %v1253 = vsub.s32 0, %v1252
      %v1254 = vrot.slane %v786, %v1253
      %v1256 = vadd.f32 %v1234, %v1254
      %v1257 = vadd.f32 %v1235, %v1254
      %v1258 = vadd.f32 %v1236, %v1254
      %v1259 = vadd.f32 %v1237, %v1254
      %v1260 = vadd.f32 %v1238, %v1254
      %v1261 = vadd.f32 %v1239, %v1254
      %v1262 = vadd.f32 %v1240, %v1254
      %v1263 = vadd.f32 %v1241, %v1254
      %v1264 = vadd.f32 %v1242, %v1254
      %v1265 = vadd.f32 %v1243, %v1254
      %v1266 = vadd.f32 %v1244, %v1254
      %v1267 = vadd.f32 %v1245, %v1254
      %v1268 = vadd.f32 %v1246, %v1254
      %v1269 = vadd.f32 %v1247, %v1254
      %v1270 = vadd.f32 %v1248, %v1254
      %v1271 = vadd.f32 %v1249, %v1254
      %v1272 = vmax.f32 %v1256, 0.0
      %v1273 = vmax.f32 %v1257, 0.0
      %v1274 = vmax.f32 %v1258, 0.0
      %v1275 = vmax.f32 %v1259, 0.0
      %v1276 = vmax.f32 %v1260, 0.0
      %v1277 = vmax.f32 %v1261, 0.0
      %v1278 = vmax.f32 %v1262, 0.0
      %v1279 = vmax.f32 %v1263, 0.0
      %v1280 = vmax.f32 %v1264, 0.0
      %v1281 = vmax.f32 %v1265, 0.0
      %v1282 = vmax.f32 %v1266, 0.0
      %v1283 = vmax.f32 %v1267, 0.0
      %v1284 = vmax.f32 %v1268, 0.0
      %v1285 = vmax.f32 %v1269, 0.0
      %v1286 = vmax.f32 %v1270, 0.0
      %v1287 = vmax.f32 %v1271, 0.0
      %v1288 = vmin.f32 %v1272, 6.0
      %v1289 = vmin.f32 %v1273, 6.0
      %v1290 = vmin.f32 %v1274, 6.0
      %v1291 = vmin.f32 %v1275, 6.0
      %v1292 = vmin.f32 %v1276, 6.0
      %v1293 = vmin.f32 %v1277, 6.0
      %v1294 = vmin.f32 %v1278, 6.0
      %v1295 = vmin.f32 %v1279, 6.0
      %v1296 = vmin.f32 %v1280, 6.0
      %v1297 = vmin.f32 %v1281, 6.0
      %v1298 = vmin.f32 %v1282, 6.0
      %v1299 = vmin.f32 %v1283, 6.0
      %v1300 = vmin.f32 %v1284, 6.0
      %v1301 = vmin.f32 %v1285, 6.0
      %v1302 = vmin.f32 %v1286, 6.0
      %v1303 = vmin.f32 %v1287, 6.0
      %v1305 = vlaneseq
      %v1306 = vshrl.u32 %v1305, 7
      %v1307 = vsub.s32 0, %v1306
      %v1308 = vrot.slane %v789, %v1307
      %v1311 = vsel %vm279, %v1288, 0
      %v1314 = vsel %vm279, %v1289, 0
      %v1317 = vsel %vm279, %v1290, 0
      %v1320 = vsel %vm279, %v1291, 0
      %v1323 = vsel %vm279, %v1292, 0
      %v1326 = vsel %vm279, %v1293, 0
      %v1329 = vsel %vm279, %v1294, 0
      %v1332 = vsel %vm279, %v1295, 0
      %v1335 = vsel %vm279, %v1296, 0
      %v1338 = vsel %vm279, %v1297, 0
      %v1341 = vsel %vm279, %v1298, 0
      %v1344 = vsel %vm279, %v1299, 0
      %v1347 = vsel %vm279, %v1300, 0
      %v1350 = vsel %vm279, %v1301, 0
      %v1353 = vsel %vm279, %v1302, 0
      %v1356 = vsel %vm279, %v1303, 0
      %1358 = vmatprep.subr.mxu0 0.0
      %1359 = vmatpush1.msra.mxu0 0.0
      %1360 = vmatprep.subr.mxu0 0.0
      %1361 = vmatpush1.msra.mxu0 0.0
      %1362 = vmatprep.subr.mxu0 0.0
      %1363 = vmatpush1.msra.mxu0 0.0
      %1364 = vmatprep.subr.mxu0 0.0
      %1365 = vmatpush1.msra.mxu0 0.0
      %1366 = vmatprep.subr.mxu0 0.0
      %1367 = vmatpush1.msra.mxu0 0.0
      %1368 = vmatprep.subr.mxu0 0.0
      %1369 = vmatpush1.msra.mxu0 0.0
      %1370 = vmatprep.subr.mxu0 0.0
      %1371 = vmatpush1.msra.mxu0 0.0
      %1372 = vmatprep.subr.mxu0 0.0
      %1373 = vmatpush1.msra.mxu0 0.0
      %1374 = vmatprep.subr.mxu0 0.0
      %1375 = vmatpush1.msra.mxu0 0.0
      %1376 = vmatprep.subr.mxu0 0.0
      %1377 = vmatpush1.msra.mxu0 0.0
      %1378 = vmatprep.subr.mxu0 0.0
      %1379 = vmatpush1.msra.mxu0 0.0
      %1380 = vmatprep.subr.mxu0 0.0
      %1381 = vmatpush1.msra.mxu0 0.0
      %1382 = vmatprep.subr.mxu0 0.0
      %1383 = vmatpush1.msra.mxu0 0.0
      %1384 = vmatprep.subr.mxu0 0.0
      %1385 = vmatpush1.msra.mxu0 0.0
      %1386 = vmatprep.subr.mxu0 0.0
      %1387 = vmatpush1.msra.mxu0 %v788
      %1388 = vmatprep.subr.mxu0 0.0
      %1389 = vmatpush1.msra.mxu0 %v787
      %1390 = vmatprep.subr.mxu0 0.0
      %1391 = vmatpush2.msra.mxu0 0.0
      %1392 = vmatprep.subr.mxu0 0.0
      %1393 = vmatpush2.msra.mxu0 0.0
      %1394 = vmatprep.subr.mxu0 0.0
      %1395 = vmatpush2.msra.mxu0 0.0
      %1396 = vmatprep.subr.mxu0 0.0
      %1397 = vmatpush2.msra.mxu0 0.0
      %1398 = vmatprep.subr.mxu0 0.0
      %1399 = vmatpush2.msra.mxu0 0.0
      %1400 = vmatprep.subr.mxu0 0.0
      %1401 = vmatpush2.msra.mxu0 0.0
      %1402 = vmatprep.subr.mxu0 0.0
      %1403 = vmatpush2.msra.mxu0 0.0
      %1404 = vmatprep.subr.mxu0 0.0
      %1405 = vmatpush2.msra.mxu0 0.0
      %1406 = vmatprep.subr.mxu0 0.0
      %1407 = vmatpush2.msra.mxu0 0.0
      %1408 = vmatprep.subr.mxu0 0.0
      %1409 = vmatpush2.msra.mxu0 0.0
      %1410 = vmatprep.subr.mxu0 0.0
      %1411 = vmatpush2.msra.mxu0 0.0
      %1412 = vmatprep.subr.mxu0 0.0
      %1413 = vmatpush2.msra.mxu0 0.0
      %1414 = vmatprep.subr.mxu0 0.0
      %1415 = vmatpush2.msra.mxu0 0.0
      %1416 = vmatprep.subr.mxu0 0.0
      %1417 = vmatpush2.msra.mxu0 0.0
      %1418 = vmatprep.subr.mxu0 0.0
      %1419 = vmatpush2.msra.mxu0 0.0
      %1420 = vmatprep.subr.mxu0 0.0
      %1421 = vmatpush2.msra.mxu0 0.0
      %1422 = vmatprep.mubr.f32.mxu0 0.0
      %1423 = vmatmul.mubr.f32.gmra.mxu0 %v1311
      %v1424 = vpop.f32.mrf.mxu0
      %v1425 = vadd.f32 %v1308, %v1424
      %v1426 = vpop.f32.mrf.mxu0
      %1427 = vmatprep.mubr.f32.mxu0 0.0
      %1428 = vmatmul.mubr.f32.gmra.mxu0 %v1314
      %v1429 = vpop.f32.mrf.mxu0
      %v1430 = vadd.f32 %v1308, %v1429
      %v1431 = vpop.f32.mrf.mxu0
      %1432 = vmatprep.mubr.f32.mxu0 0.0
      %1433 = vmatmul.mubr.f32.gmra.mxu0 %v1317
      %v1434 = vpop.f32.mrf.mxu0
      %v1435 = vadd.f32 %v1308, %v1434
      %v1436 = vpop.f32.mrf.mxu0
      %1437 = vmatprep.mubr.f32.mxu0 0.0
      %1438 = vmatmul.mubr.f32.gmra.mxu0 %v1320
      %v1439 = vpop.f32.mrf.mxu0
      %v1440 = vadd.f32 %v1308, %v1439
      %v1441 = vpop.f32.mrf.mxu0
      %1442 = vmatprep.mubr.f32.mxu0 0.0
      %1443 = vmatmul.mubr.f32.gmra.mxu0 %v1323
      %v1444 = vpop.f32.mrf.mxu0
      %v1445 = vadd.f32 %v1308, %v1444
      %v1446 = vpop.f32.mrf.mxu0
      %1447 = vmatprep.mubr.f32.mxu0 0.0
      %1448 = vmatmul.mubr.f32.gmra.mxu0 %v1326
      %v1449 = vpop.f32.mrf.mxu0
      %v1450 = vadd.f32 %v1308, %v1449
      %v1451 = vpop.f32.mrf.mxu0
      %1452 = vmatprep.mubr.f32.mxu0 0.0
      %1453 = vmatmul.mubr.f32.gmra.mxu0 %v1329
      %v1454 = vpop.f32.mrf.mxu0
      %v1455 = vadd.f32 %v1308, %v1454
      %v1456 = vpop.f32.mrf.mxu0
      %1457 = vmatprep.mubr.f32.mxu0 0.0
      %1458 = vmatmul.mubr.f32.gmra.mxu0 %v1332
      %v1459 = vpop.f32.mrf.mxu0
      %v1460 = vadd.f32 %v1308, %v1459
      %v1461 = vpop.f32.mrf.mxu0
      %1462 = vmatprep.mubr.f32.mxu0 0.0
      %1463 = vmatmul.mubr.f32.gmra.mxu0 %v1335
      %v1464 = vpop.f32.mrf.mxu0
      %v1465 = vadd.f32 %v1308, %v1464
      %v1466 = vpop.f32.mrf.mxu0
      %1467 = vmatprep.mubr.f32.mxu0 0.0
      %1468 = vmatmul.mubr.f32.gmra.mxu0 %v1338
      %v1469 = vpop.f32.mrf.mxu0
      %v1470 = vadd.f32 %v1308, %v1469
      %v1471 = vpop.f32.mrf.mxu0
      %1472 = vmatprep.mubr.f32.mxu0 0.0
      %1473 = vmatmul.mubr.f32.gmra.mxu0 %v1341
      %v1474 = vpop.f32.mrf.mxu0
      %v1475 = vadd.f32 %v1308, %v1474
      %v1476 = vpop.f32.mrf.mxu0
      %1477 = vmatprep.mubr.f32.mxu0 0.0
      %1478 = vmatmul.mubr.f32.gmra.mxu0 %v1344
      %v1479 = vpop.f32.mrf.mxu0
      %v1480 = vadd.f32 %v1308, %v1479
      %v1481 = vpop.f32.mrf.mxu0
      %1482 = vmatprep.mubr.f32.mxu0 0.0
      %1483 = vmatmul.mubr.f32.gmra.mxu0 %v1347
      %v1484 = vpop.f32.mrf.mxu0
      %v1485 = vadd.f32 %v1308, %v1484
      %v1486 = vpop.f32.mrf.mxu0
      %1487 = vmatprep.mubr.f32.mxu0 0.0
      %1488 = vmatmul.mubr.f32.gmra.mxu0 %v1350
      %v1489 = vpop.f32.mrf.mxu0
      %v1490 = vadd.f32 %v1308, %v1489
      %v1491 = vpop.f32.mrf.mxu0
      %1492 = vmatprep.mubr.f32.mxu0 0.0
      %1493 = vmatmul.mubr.f32.gmra.mxu0 %v1353
      %v1494 = vpop.f32.mrf.mxu0
      %v1495 = vadd.f32 %v1308, %v1494
      %v1496 = vpop.f32.mrf.mxu0
      %1497 = vmatprep.mubr.f32.mxu0 0.0
      %1498 = vmatmul.mubr.f32.gmra.mxu0 %v1356
      %v1499 = vpop.f32.mrf.mxu0
      %v1500 = vadd.f32 %v1308, %v1499
      %v1501 = vpop.f32.mrf.mxu0
      %1502 = vdwg.mxu0
      %s1503 = smul.u32 0, 16
      %s1504 = scalar_lea.vmem %s273, %s1503
      %v1505 = vld [vmem:[%s1504] sm:$0xff]
      %v1506 = vld [vmem:[%s1504 + $0x8] sm:$0xff]
      %v1507 = vld [vmem:[%s1504 + $0x10] sm:$0xff]
      %v1508 = vld [vmem:[%s1504 + $0x18] sm:$0xff]
      %v1509 = vld [vmem:[%s1504 + $0x20] sm:$0xff]
      %v1510 = vld [vmem:[%s1504 + $0x28] sm:$0xff]
      %v1511 = vld [vmem:[%s1504 + $0x30] sm:$0xff]
      %v1512 = vld [vmem:[%s1504 + $0x38] sm:$0xff]
      %v1513 = vld [vmem:[%s1504 + $0x40] sm:$0xff]
      %v1514 = vld [vmem:[%s1504 + $0x48] sm:$0xff]
      %v1515 = vld [vmem:[%s1504 + $0x50] sm:$0xff]
      %v1516 = vld [vmem:[%s1504 + $0x58] sm:$0xff]
      %v1517 = vld [vmem:[%s1504 + $0x60] sm:$0xff]
      %v1518 = vld [vmem:[%s1504 + $0x68] sm:$0xff]
      %v1519 = vld [vmem:[%s1504 + $0x70] sm:$0xff]
      %v1520 = vld [vmem:[%s1504 + $0x78] sm:$0xff]
      %v1521 = vadd.f32 %v1425, %v1505
      %v1522 = vadd.f32 %v1430, %v1506
      %v1523 = vadd.f32 %v1435, %v1507
      %v1524 = vadd.f32 %v1440, %v1508
      %v1525 = vadd.f32 %v1445, %v1509
      %v1526 = vadd.f32 %v1450, %v1510
      %v1527 = vadd.f32 %v1455, %v1511
      %v1528 = vadd.f32 %v1460, %v1512
      %v1529 = vadd.f32 %v1465, %v1513
      %v1530 = vadd.f32 %v1470, %v1514
      %v1531 = vadd.f32 %v1475, %v1515
      %v1532 = vadd.f32 %v1480, %v1516
      %v1533 = vadd.f32 %v1485, %v1517
      %v1534 = vadd.f32 %v1490, %v1518
      %v1535 = vadd.f32 %v1495, %v1519
      %v1536 = vadd.f32 %v1500, %v1520
      %s1537 = scalar_lea.vmem %s278, %s1503
      %1538 = vst.msk [vmem:[%s1537] sm:$0xff] %vm362, %v1521
      %1539 = vst.msk [vmem:[%s1537 + $0x8] sm:$0xff] %vm362, %v1522
      %1540 = vst.msk [vmem:[%s1537 + $0x10] sm:$0xff] %vm362, %v1523
      %1541 = vst.msk [vmem:[%s1537 + $0x18] sm:$0xff] %vm362, %v1524
      %1542 = vst.msk [vmem:[%s1537 + $0x20] sm:$0xff] %vm362, %v1525
      %1543 = vst.msk [vmem:[%s1537 + $0x28] sm:$0xff] %vm362, %v1526
      %1544 = vst.msk [vmem:[%s1537 + $0x30] sm:$0xff] %vm362, %v1527
      %1545 = vst.msk [vmem:[%s1537 + $0x38] sm:$0xff] %vm362, %v1528
      %1546 = vst.msk [vmem:[%s1537 + $0x40] sm:$0xff] %vm362, %v1529
      %1547 = vst.msk [vmem:[%s1537 + $0x48] sm:$0xff] %vm362, %v1530
      %1548 = vst.msk [vmem:[%s1537 + $0x50] sm:$0xff] %vm362, %v1531
      %1549 = vst.msk [vmem:[%s1537 + $0x58] sm:$0xff] %vm362, %v1532
      %1550 = vst.msk [vmem:[%s1537 + $0x60] sm:$0xff] %vm362, %v1533
      %1551 = vst.msk [vmem:[%s1537 + $0x68] sm:$0xff] %vm362, %v1534
      %1552 = vst.msk [vmem:[%s1537 + $0x70] sm:$0xff] %vm362, %v1535
      %1553 = vst.msk [vmem:[%s1537 + $0x78] sm:$0xff] %vm362, %v1536
      %s1554 = smul.u32 8, 32
      %s1555 = scalar_lea.vmem [#allocation2], %s1554
      %v1556 = vld [vmem:[%s1555 + $0x7] sm:$0xff]
      %v1557 = vld [vmem:[%s1555 + $0xf] sm:$0xff]
      %v1558 = vld [vmem:[%s1555 + $0x27] sm:$0xff]
      %v1559 = vld [vmem:[%s1555 + $0x2f] sm:$0xff]
      %v1560 = vld [vmem:[%s1555 + $0x47] sm:$0xff]
      %v1561 = vld [vmem:[%s1555 + $0x4f] sm:$0xff]
      %v1562 = vld [vmem:[%s1555 + $0x67] sm:$0xff]
      %v1563 = vld [vmem:[%s1555 + $0x6f] sm:$0xff]
      %v1564 = vld [vmem:[%s1555 + $0x87] sm:$0xff]
      %v1565 = vld [vmem:[%s1555 + $0x8f] sm:$0xff]
      %v1566 = vld [vmem:[%s1555 + $0xa7] sm:$0xff]
      %v1567 = vld [vmem:[%s1555 + $0xaf] sm:$0xff]
      %v1568 = vld [vmem:[%s1555 + $0xc7] sm:$0xff]
      %v1569 = vld [vmem:[%s1555 + $0xcf] sm:$0xff]
      %v1570 = vld [vmem:[%s1555 + $0xe7] sm:$0xff]
      %v1571 = vld [vmem:[%s1555 + $0xef] sm:$0xff]
      %v1572 = vmul.f32 %v1556, %v811
      %v1573 = vmul.f32 %v1557, %v811
      %v1574 = vmul.f32 %v1558, %v811
      %v1575 = vmul.f32 %v1559, %v811
      %v1576 = vmul.f32 %v1560, %v811
      %v1577 = vmul.f32 %v1561, %v811
      %v1578 = vmul.f32 %v1562, %v811
      %v1579 = vmul.f32 %v1563, %v811
      %v1580 = vmul.f32 %v1564, %v811
      %v1581 = vmul.f32 %v1565, %v811
      %v1582 = vmul.f32 %v1566, %v811
      %v1583 = vmul.f32 %v1567, %v811
      %v1584 = vmul.f32 %v1568, %v811
      %v1585 = vmul.f32 %v1569, %v811
      %v1586 = vmul.f32 %v1570, %v811
      %v1587 = vmul.f32 %v1571, %v811
      %v1588 = vld [vmem:[%s1555 + $0x8] sm:$0xff]
      %v1589 = vld [vmem:[%s1555 + $0x10] sm:$0xff]
      %v1590 = vld [vmem:[%s1555 + $0x28] sm:$0xff]
      %v1591 = vld [vmem:[%s1555 + $0x30] sm:$0xff]
      %v1592 = vld [vmem:[%s1555 + $0x48] sm:$0xff]
      %v1593 = vld [vmem:[%s1555 + $0x50] sm:$0xff]
      %v1594 = vld [vmem:[%s1555 + $0x68] sm:$0xff]
      %v1595 = vld [vmem:[%s1555 + $0x70] sm:$0xff]
      %v1596 = vld [vmem:[%s1555 + $0x88] sm:$0xff]
      %v1597 = vld [vmem:[%s1555 + $0x90] sm:$0xff]
      %v1598 = vld [vmem:[%s1555 + $0xa8] sm:$0xff]
      %v1599 = vld [vmem:[%s1555 + $0xb0] sm:$0xff]
      %v1600 = vld [vmem:[%s1555 + $0xc8] sm:$0xff]
      %v1601 = vld [vmem:[%s1555 + $0xd0] sm:$0xff]
      %v1602 = vld [vmem:[%s1555 + $0xe8] sm:$0xff]
      %v1603 = vld [vmem:[%s1555 + $0xf0] sm:$0xff]
      %v1604 = vmul.f32 %v1588, %v847
      %v1605 = vmul.f32 %v1589, %v847
      %v1606 = vmul.f32 %v1590, %v847
      %v1607 = vmul.f32 %v1591, %v847
      %v1608 = vmul.f32 %v1592, %v847
      %v1609 = vmul.f32 %v1593, %v847
      %v1610 = vmul.f32 %v1594, %v847
      %v1611 = vmul.f32 %v1595, %v847
      %v1612 = vmul.f32 %v1596, %v847
      %v1613 = vmul.f32 %v1597, %v847
      %v1614 = vmul.f32 %v1598, %v847
      %v1615 = vmul.f32 %v1599, %v847
      %v1616 = vmul.f32 %v1600, %v847
      %v1617 = vmul.f32 %v1601, %v847
      %v1618 = vmul.f32 %v1602, %v847
      %v1619 = vmul.f32 %v1603, %v847
      %v1620 = vadd.f32 %v1572, %v1604
      %v1621 = vadd.f32 %v1573, %v1605
      %v1622 = vadd.f32 %v1574, %v1606
      %v1623 = vadd.f32 %v1575, %v1607
      %v1624 = vadd.f32 %v1576, %v1608
      %v1625 = vadd.f32 %v1577, %v1609
      %v1626 = vadd.f32 %v1578, %v1610
      %v1627 = vadd.f32 %v1579, %v1611
      %v1628 = vadd.f32 %v1580, %v1612
      %v1629 = vadd.f32 %v1581, %v1613
      %v1630 = vadd.f32 %v1582, %v1614
      %v1631 = vadd.f32 %v1583, %v1615
      %v1632 = vadd.f32 %v1584, %v1616
      %v1633 = vadd.f32 %v1585, %v1617
      %v1634 = vadd.f32 %v1586, %v1618
      %v1635 = vadd.f32 %v1587, %v1619
      %v1636 = vld [vmem:[%s1555 + $0x9] sm:$0xff]
      %v1637 = vld [vmem:[%s1555 + $0x11] sm:$0xff]
      %v1638 = vld [vmem:[%s1555 + $0x29] sm:$0xff]
      %v1639 = vld [vmem:[%s1555 + $0x31] sm:$0xff]
      %v1640 = vld [vmem:[%s1555 + $0x49] sm:$0xff]
      %v1641 = vld [vmem:[%s1555 + $0x51] sm:$0xff]
      %v1642 = vld [vmem:[%s1555 + $0x69] sm:$0xff]
      %v1643 = vld [vmem:[%s1555 + $0x71] sm:$0xff]
      %v1644 = vld [vmem:[%s1555 + $0x89] sm:$0xff]
      %v1645 = vld [vmem:[%s1555 + $0x91] sm:$0xff]
      %v1646 = vld [vmem:[%s1555 + $0xa9] sm:$0xff]
      %v1647 = vld [vmem:[%s1555 + $0xb1] sm:$0xff]
      %v1648 = vld [vmem:[%s1555 + $0xc9] sm:$0xff]
      %v1649 = vld [vmem:[%s1555 + $0xd1] sm:$0xff]
      %v1650 = vld [vmem:[%s1555 + $0xe9] sm:$0xff]
      %v1651 = vld [vmem:[%s1555 + $0xf1] sm:$0xff]
      %v1652 = vmul.f32 %v1636, %v899
      %v1653 = vmul.f32 %v1637, %v899
      %v1654 = vmul.f32 %v1638, %v899
      %v1655 = vmul.f32 %v1639, %v899
      %v1656 = vmul.f32 %v1640, %v899
      %v1657 = vmul.f32 %v1641, %v899
      %v1658 = vmul.f32 %v1642, %v899
      %v1659 = vmul.f32 %v1643, %v899
      %v1660 = vmul.f32 %v1644, %v899
      %v1661 = vmul.f32 %v1645, %v899
      %v1662 = vmul.f32 %v1646, %v899
      %v1663 = vmul.f32 %v1647, %v899
      %v1664 = vmul.f32 %v1648, %v899
      %v1665 = vmul.f32 %v1649, %v899
      %v1666 = vmul.f32 %v1650, %v899
      %v1667 = vmul.f32 %v1651, %v899
      %v1668 = vadd.f32 %v1620, %v1652
      %v1669 = vadd.f32 %v1621, %v1653
      %v1670 = vadd.f32 %v1622, %v1654
      %v1671 = vadd.f32 %v1623, %v1655
      %v1672 = vadd.f32 %v1624, %v1656
      %v1673 = vadd.f32 %v1625, %v1657
      %v1674 = vadd.f32 %v1626, %v1658
      %v1675 = vadd.f32 %v1627, %v1659
      %v1676 = vadd.f32 %v1628, %v1660
      %v1677 = vadd.f32 %v1629, %v1661
      %v1678 = vadd.f32 %v1630, %v1662
      %v1679 = vadd.f32 %v1631, %v1663
      %v1680 = vadd.f32 %v1632, %v1664
      %v1681 = vadd.f32 %v1633, %v1665
      %v1682 = vadd.f32 %v1634, %v1666
      %v1683 = vadd.f32 %v1635, %v1667
      %s1684 = sadd.s32 8, 1
      %s1685 = smul.u32 %s1684, 32
      %s1686 = scalar_lea.vmem [#allocation2], %s1685
      %v1687 = vld [vmem:[%s1686 + $0x7] sm:$0xff]
      %v1688 = vld [vmem:[%s1686 + $0xf] sm:$0xff]
      %v1689 = vld [vmem:[%s1686 + $0x27] sm:$0xff]
      %v1690 = vld [vmem:[%s1686 + $0x2f] sm:$0xff]
      %v1691 = vld [vmem:[%s1686 + $0x47] sm:$0xff]
      %v1692 = vld [vmem:[%s1686 + $0x4f] sm:$0xff]
      %v1693 = vld [vmem:[%s1686 + $0x67] sm:$0xff]
      %v1694 = vld [vmem:[%s1686 + $0x6f] sm:$0xff]
      %v1695 = vld [vmem:[%s1686 + $0x87] sm:$0xff]
      %v1696 = vld [vmem:[%s1686 + $0x8f] sm:$0xff]
      %v1697 = vld [vmem:[%s1686 + $0xa7] sm:$0xff]
      %v1698 = vld [vmem:[%s1686 + $0xaf] sm:$0xff]
      %v1699 = vld [vmem:[%s1686 + $0xc7] sm:$0xff]
      %v1700 = vld [vmem:[%s1686 + $0xcf] sm:$0xff]
      %v1701 = vld [vmem:[%s1686 + $0xe7] sm:$0xff]
      %v1702 = vld [vmem:[%s1686 + $0xef] sm:$0xff]
      %v1703 = vmul.f32 %v1687, %v954
      %v1704 = vmul.f32 %v1688, %v954
      %v1705 = vmul.f32 %v1689, %v954
      %v1706 = vmul.f32 %v1690, %v954
      %v1707 = vmul.f32 %v1691, %v954
      %v1708 = vmul.f32 %v1692, %v954
      %v1709 = vmul.f32 %v1693, %v954
      %v1710 = vmul.f32 %v1694, %v954
      %v1711 = vmul.f32 %v1695, %v954
      %v1712 = vmul.f32 %v1696, %v954
      %v1713 = vmul.f32 %v1697, %v954
      %v1714 = vmul.f32 %v1698, %v954
      %v1715 = vmul.f32 %v1699, %v954
      %v1716 = vmul.f32 %v1700, %v954
      %v1717 = vmul.f32 %v1701, %v954
      %v1718 = vmul.f32 %v1702, %v954
      %v1719 = vadd.f32 %v1668, %v1703
      %v1720 = vadd.f32 %v1669, %v1704
      %v1721 = vadd.f32 %v1670, %v1705
      %v1722 = vadd.f32 %v1671, %v1706
      %v1723 = vadd.f32 %v1672, %v1707
      %v1724 = vadd.f32 %v1673, %v1708
      %v1725 = vadd.f32 %v1674, %v1709
      %v1726 = vadd.f32 %v1675, %v1710
      %v1727 = vadd.f32 %v1676, %v1711
      %v1728 = vadd.f32 %v1677, %v1712
      %v1729 = vadd.f32 %v1678, %v1713
      %v1730 = vadd.f32 %v1679, %v1714
      %v1731 = vadd.f32 %v1680, %v1715
      %v1732 = vadd.f32 %v1681, %v1716
      %v1733 = vadd.f32 %v1682, %v1717
      %v1734 = vadd.f32 %v1683, %v1718
      %v1735 = vld [vmem:[%s1686 + $0x8] sm:$0xff]
      %v1736 = vld [vmem:[%s1686 + $0x10] sm:$0xff]
      %v1737 = vld [vmem:[%s1686 + $0x28] sm:$0xff]
      %v1738 = vld [vmem:[%s1686 + $0x30] sm:$0xff]
      %v1739 = vld [vmem:[%s1686 + $0x48] sm:$0xff]
      %v1740 = vld [vmem:[%s1686 + $0x50] sm:$0xff]
      %v1741 = vld [vmem:[%s1686 + $0x68] sm:$0xff]
      %v1742 = vld [vmem:[%s1686 + $0x70] sm:$0xff]
      %v1743 = vld [vmem:[%s1686 + $0x88] sm:$0xff]
      %v1744 = vld [vmem:[%s1686 + $0x90] sm:$0xff]
      %v1745 = vld [vmem:[%s1686 + $0xa8] sm:$0xff]
      %v1746 = vld [vmem:[%s1686 + $0xb0] sm:$0xff]
      %v1747 = vld [vmem:[%s1686 + $0xc8] sm:$0xff]
      %v1748 = vld [vmem:[%s1686 + $0xd0] sm:$0xff]
      %v1749 = vld [vmem:[%s1686 + $0xe8] sm:$0xff]
      %v1750 = vld [vmem:[%s1686 + $0xf0] sm:$0xff]
      %v1751 = vmul.f32 %v1735, %v1006
      %v1752 = vmul.f32 %v1736, %v1006
      %v1753 = vmul.f32 %v1737, %v1006
      %v1754 = vmul.f32 %v1738, %v1006
      %v1755 = vmul.f32 %v1739, %v1006
      %v1756 = vmul.f32 %v1740, %v1006
      %v1757 = vmul.f32 %v1741, %v1006
      %v1758 = vmul.f32 %v1742, %v1006
      %v1759 = vmul.f32 %v1743, %v1006
      %v1760 = vmul.f32 %v1744, %v1006
      %v1761 = vmul.f32 %v1745, %v1006
      %v1762 = vmul.f32 %v1746, %v1006
      %v1763 = vmul.f32 %v1747, %v1006
      %v1764 = vmul.f32 %v1748, %v1006
      %v1765 = vmul.f32 %v1749, %v1006
      %v1766 = vmul.f32 %v1750, %v1006
      %v1767 = vadd.f32 %v1719, %v1751
      %v1768 = vadd.f32 %v1720, %v1752
      %v1769 = vadd.f32 %v1721, %v1753
      %v1770 = vadd.f32 %v1722, %v1754
      %v1771 = vadd.f32 %v1723, %v1755
      %v1772 = vadd.f32 %v1724, %v1756
      %v1773 = vadd.f32 %v1725, %v1757
      %v1774 = vadd.f32 %v1726, %v1758
      %v1775 = vadd.f32 %v1727, %v1759
      %v1776 = vadd.f32 %v1728, %v1760
      %v1777 = vadd.f32 %v1729, %v1761
      %v1778 = vadd.f32 %v1730, %v1762
      %v1779 = vadd.f32 %v1731, %v1763
      %v1780 = vadd.f32 %v1732, %v1764
      %v1781 = vadd.f32 %v1733, %v1765
      %v1782 = vadd.f32 %v1734, %v1766
      %v1783 = vld [vmem:[%s1686 + $0x9] sm:$0xff]
      %v1784 = vld [vmem:[%s1686 + $0x11] sm:$0xff]
      %v1785 = vld [vmem:[%s1686 + $0x29] sm:$0xff]
      %v1786 = vld [vmem:[%s1686 + $0x31] sm:$0xff]
      %v1787 = vld [vmem:[%s1686 + $0x49] sm:$0xff]
      %v1788 = vld [vmem:[%s1686 + $0x51] sm:$0xff]
      %v1789 = vld [vmem:[%s1686 + $0x69] sm:$0xff]
      %v1790 = vld [vmem:[%s1686 + $0x71] sm:$0xff]
      %v1791 = vld [vmem:[%s1686 + $0x89] sm:$0xff]
      %v1792 = vld [vmem:[%s1686 + $0x91] sm:$0xff]
      %v1793 = vld [vmem:[%s1686 + $0xa9] sm:$0xff]
      %v1794 = vld [vmem:[%s1686 + $0xb1] sm:$0xff]
      %v1795 = vld [vmem:[%s1686 + $0xc9] sm:$0xff]
      %v1796 = vld [vmem:[%s1686 + $0xd1] sm:$0xff]
      %v1797 = vld [vmem:[%s1686 + $0xe9] sm:$0xff]
      %v1798 = vld [vmem:[%s1686 + $0xf1] sm:$0xff]
      %v1799 = vmul.f32 %v1783, %v1058
      %v1800 = vmul.f32 %v1784, %v1058
      %v1801 = vmul.f32 %v1785, %v1058
      %v1802 = vmul.f32 %v1786, %v1058
      %v1803 = vmul.f32 %v1787, %v1058
      %v1804 = vmul.f32 %v1788, %v1058
      %v1805 = vmul.f32 %v1789, %v1058
      %v1806 = vmul.f32 %v1790, %v1058
      %v1807 = vmul.f32 %v1791, %v1058
      %v1808 = vmul.f32 %v1792, %v1058
      %v1809 = vmul.f32 %v1793, %v1058
      %v1810 = vmul.f32 %v1794, %v1058
      %v1811 = vmul.f32 %v1795, %v1058
      %v1812 = vmul.f32 %v1796, %v1058
      %v1813 = vmul.f32 %v1797, %v1058
      %v1814 = vmul.f32 %v1798, %v1058
      %v1815 = vadd.f32 %v1767, %v1799
      %v1816 = vadd.f32 %v1768, %v1800
      %v1817 = vadd.f32 %v1769, %v1801
      %v1818 = vadd.f32 %v1770, %v1802
      %v1819 = vadd.f32 %v1771, %v1803
      %v1820 = vadd.f32 %v1772, %v1804
      %v1821 = vadd.f32 %v1773, %v1805
      %v1822 = vadd.f32 %v1774, %v1806
      %v1823 = vadd.f32 %v1775, %v1807
      %v1824 = vadd.f32 %v1776, %v1808
      %v1825 = vadd.f32 %v1777, %v1809
      %v1826 = vadd.f32 %v1778, %v1810
      %v1827 = vadd.f32 %v1779, %v1811
      %v1828 = vadd.f32 %v1780, %v1812
      %v1829 = vadd.f32 %v1781, %v1813
      %v1830 = vadd.f32 %v1782, %v1814
      %s1831 = sadd.s32 8, 2
      %s1832 = smul.u32 %s1831, 32
      %s1833 = scalar_lea.vmem [#allocation2], %s1832
      %v1834 = vld [vmem:[%s1833 + $0x7] sm:$0xff]
      %v1835 = vld [vmem:[%s1833 + $0xf] sm:$0xff]
      %v1836 = vld [vmem:[%s1833 + $0x27] sm:$0xff]
      %v1837 = vld [vmem:[%s1833 + $0x2f] sm:$0xff]
      %v1838 = vld [vmem:[%s1833 + $0x47] sm:$0xff]
      %v1839 = vld [vmem:[%s1833 + $0x4f] sm:$0xff]
      %v1840 = vld [vmem:[%s1833 + $0x67] sm:$0xff]
      %v1841 = vld [vmem:[%s1833 + $0x6f] sm:$0xff]
      %v1842 = vld [vmem:[%s1833 + $0x87] sm:$0xff]
      %v1843 = vld [vmem:[%s1833 + $0x8f] sm:$0xff]
      %v1844 = vld [vmem:[%s1833 + $0xa7] sm:$0xff]
      %v1845 = vld [vmem:[%s1833 + $0xaf] sm:$0xff]
      %v1846 = vld [vmem:[%s1833 + $0xc7] sm:$0xff]
      %v1847 = vld [vmem:[%s1833 + $0xcf] sm:$0xff]
      %v1848 = vld [vmem:[%s1833 + $0xe7] sm:$0xff]
      %v1849 = vld [vmem:[%s1833 + $0xef] sm:$0xff]
      %v1850 = vmul.f32 %v1834, %v1113
      %v1851 = vmul.f32 %v1835, %v1113
      %v1852 = vmul.f32 %v1836, %v1113
      %v1853 = vmul.f32 %v1837, %v1113
      %v1854 = vmul.f32 %v1838, %v1113
      %v1855 = vmul.f32 %v1839, %v1113
      %v1856 = vmul.f32 %v1840, %v1113
      %v1857 = vmul.f32 %v1841, %v1113
      %v1858 = vmul.f32 %v1842, %v1113
      %v1859 = vmul.f32 %v1843, %v1113
      %v1860 = vmul.f32 %v1844, %v1113
      %v1861 = vmul.f32 %v1845, %v1113
      %v1862 = vmul.f32 %v1846, %v1113
      %v1863 = vmul.f32 %v1847, %v1113
      %v1864 = vmul.f32 %v1848, %v1113
      %v1865 = vmul.f32 %v1849, %v1113
      %v1866 = vadd.f32 %v1815, %v1850
      %v1867 = vadd.f32 %v1816, %v1851
      %v1868 = vadd.f32 %v1817, %v1852
      %v1869 = vadd.f32 %v1818, %v1853
      %v1870 = vadd.f32 %v1819, %v1854
      %v1871 = vadd.f32 %v1820, %v1855
      %v1872 = vadd.f32 %v1821, %v1856
      %v1873 = vadd.f32 %v1822, %v1857
      %v1874 = vadd.f32 %v1823, %v1858
      %v1875 = vadd.f32 %v1824, %v1859
      %v1876 = vadd.f32 %v1825, %v1860
      %v1877 = vadd.f32 %v1826, %v1861
      %v1878 = vadd.f32 %v1827, %v1862
      %v1879 = vadd.f32 %v1828, %v1863
      %v1880 = vadd.f32 %v1829, %v1864
      %v1881 = vadd.f32 %v1830, %v1865
      %v1882 = vld [vmem:[%s1833 + $0x8] sm:$0xff]
      %v1883 = vld [vmem:[%s1833 + $0x10] sm:$0xff]
      %v1884 = vld [vmem:[%s1833 + $0x28] sm:$0xff]
      %v1885 = vld [vmem:[%s1833 + $0x30] sm:$0xff]
      %v1886 = vld [vmem:[%s1833 + $0x48] sm:$0xff]
      %v1887 = vld [vmem:[%s1833 + $0x50] sm:$0xff]
      %v1888 = vld [vmem:[%s1833 + $0x68] sm:$0xff]
      %v1889 = vld [vmem:[%s1833 + $0x70] sm:$0xff]
      %v1890 = vld [vmem:[%s1833 + $0x88] sm:$0xff]
      %v1891 = vld [vmem:[%s1833 + $0x90] sm:$0xff]
      %v1892 = vld [vmem:[%s1833 + $0xa8] sm:$0xff]
      %v1893 = vld [vmem:[%s1833 + $0xb0] sm:$0xff]
      %v1894 = vld [vmem:[%s1833 + $0xc8] sm:$0xff]
      %v1895 = vld [vmem:[%s1833 + $0xd0] sm:$0xff]
      %v1896 = vld [vmem:[%s1833 + $0xe8] sm:$0xff]
      %v1897 = vld [vmem:[%s1833 + $0xf0] sm:$0xff]
      %v1898 = vmul.f32 %v1882, %v1165
      %v1899 = vmul.f32 %v1883, %v1165
      %v1900 = vmul.f32 %v1884, %v1165
      %v1901 = vmul.f32 %v1885, %v1165
      %v1902 = vmul.f32 %v1886, %v1165
      %v1903 = vmul.f32 %v1887, %v1165
      %v1904 = vmul.f32 %v1888, %v1165
      %v1905 = vmul.f32 %v1889, %v1165
      %v1906 = vmul.f32 %v1890, %v1165
      %v1907 = vmul.f32 %v1891, %v1165
      %v1908 = vmul.f32 %v1892, %v1165
      %v1909 = vmul.f32 %v1893, %v1165
      %v1910 = vmul.f32 %v1894, %v1165
      %v1911 = vmul.f32 %v1895, %v1165
      %v1912 = vmul.f32 %v1896, %v1165
      %v1913 = vmul.f32 %v1897, %v1165
      %v1914 = vadd.f32 %v1866, %v1898
      %v1915 = vadd.f32 %v1867, %v1899
      %v1916 = vadd.f32 %v1868, %v1900
      %v1917 = vadd.f32 %v1869, %v1901
      %v1918 = vadd.f32 %v1870, %v1902
      %v1919 = vadd.f32 %v1871, %v1903
      %v1920 = vadd.f32 %v1872, %v1904
      %v1921 = vadd.f32 %v1873, %v1905
      %v1922 = vadd.f32 %v1874, %v1906
      %v1923 = vadd.f32 %v1875, %v1907
      %v1924 = vadd.f32 %v1876, %v1908
      %v1925 = vadd.f32 %v1877, %v1909
      %v1926 = vadd.f32 %v1878, %v1910
      %v1927 = vadd.f32 %v1879, %v1911
      %v1928 = vadd.f32 %v1880, %v1912
      %v1929 = vadd.f32 %v1881, %v1913
      %v1930 = vld [vmem:[%s1833 + $0x9] sm:$0xff]
      %v1931 = vld [vmem:[%s1833 + $0x11] sm:$0xff]
      %v1932 = vld [vmem:[%s1833 + $0x29] sm:$0xff]
      %v1933 = vld [vmem:[%s1833 + $0x31] sm:$0xff]
      %v1934 = vld [vmem:[%s1833 + $0x49] sm:$0xff]
      %v1935 = vld [vmem:[%s1833 + $0x51] sm:$0xff]
      %v1936 = vld [vmem:[%s1833 + $0x69] sm:$0xff]
      %v1937 = vld [vmem:[%s1833 + $0x71] sm:$0xff]
      %v1938 = vld [vmem:[%s1833 + $0x89] sm:$0xff]
      %v1939 = vld [vmem:[%s1833 + $0x91] sm:$0xff]
      %v1940 = vld [vmem:[%s1833 + $0xa9] sm:$0xff]
      %v1941 = vld [vmem:[%s1833 + $0xb1] sm:$0xff]
      %v1942 = vld [vmem:[%s1833 + $0xc9] sm:$0xff]
      %v1943 = vld [vmem:[%s1833 + $0xd1] sm:$0xff]
      %v1944 = vld [vmem:[%s1833 + $0xe9] sm:$0xff]
      %v1945 = vld [vmem:[%s1833 + $0xf1] sm:$0xff]
      %v1946 = vmul.f32 %v1930, %v1217
      %v1947 = vmul.f32 %v1931, %v1217
      %v1948 = vmul.f32 %v1932, %v1217
      %v1949 = vmul.f32 %v1933, %v1217
      %v1950 = vmul.f32 %v1934, %v1217
      %v1951 = vmul.f32 %v1935, %v1217
      %v1952 = vmul.f32 %v1936, %v1217
      %v1953 = vmul.f32 %v1937, %v1217
      %v1954 = vmul.f32 %v1938, %v1217
      %v1955 = vmul.f32 %v1939, %v1217
      %v1956 = vmul.f32 %v1940, %v1217
      %v1957 = vmul.f32 %v1941, %v1217
      %v1958 = vmul.f32 %v1942, %v1217
      %v1959 = vmul.f32 %v1943, %v1217
      %v1960 = vmul.f32 %v1944, %v1217
      %v1961 = vmul.f32 %v1945, %v1217
      %v1962 = vadd.f32 %v1914, %v1946
      %v1963 = vadd.f32 %v1915, %v1947
      %v1964 = vadd.f32 %v1916, %v1948
      %v1965 = vadd.f32 %v1917, %v1949
      %v1966 = vadd.f32 %v1918, %v1950
      %v1967 = vadd.f32 %v1919, %v1951
      %v1968 = vadd.f32 %v1920, %v1952
      %v1969 = vadd.f32 %v1921, %v1953
      %v1970 = vadd.f32 %v1922, %v1954
      %v1971 = vadd.f32 %v1923, %v1955
      %v1972 = vadd.f32 %v1924, %v1956
      %v1973 = vadd.f32 %v1925, %v1957
      %v1974 = vadd.f32 %v1926, %v1958
      %v1975 = vadd.f32 %v1927, %v1959
      %v1976 = vadd.f32 %v1928, %v1960
      %v1977 = vadd.f32 %v1929, %v1961
      %v1978 = vadd.f32 %v1962, %v1254
      %v1979 = vadd.f32 %v1963, %v1254
      %v1980 = vadd.f32 %v1964, %v1254
      %v1981 = vadd.f32 %v1965, %v1254
      %v1982 = vadd.f32 %v1966, %v1254
      %v1983 = vadd.f32 %v1967, %v1254
      %v1984 = vadd.f32 %v1968, %v1254
      %v1985 = vadd.f32 %v1969, %v1254
      %v1986 = vadd.f32 %v1970, %v1254
      %v1987 = vadd.f32 %v1971, %v1254
      %v1988 = vadd.f32 %v1972, %v1254
      %v1989 = vadd.f32 %v1973, %v1254
      %v1990 = vadd.f32 %v1974, %v1254
      %v1991 = vadd.f32 %v1975, %v1254
      %v1992 = vadd.f32 %v1976, %v1254
      %v1993 = vadd.f32 %v1977, %v1254
      %v1994 = vmax.f32 %v1978, 0.0
      %v1995 = vmax.f32 %v1979, 0.0
      %v1996 = vmax.f32 %v1980, 0.0
      %v1997 = vmax.f32 %v1981, 0.0
      %v1998 = vmax.f32 %v1982, 0.0
      %v1999 = vmax.f32 %v1983, 0.0
      %v2000 = vmax.f32 %v1984, 0.0
      %v2001 = vmax.f32 %v1985, 0.0
      %v2002 = vmax.f32 %v1986, 0.0
      %v2003 = vmax.f32 %v1987, 0.0
      %v2004 = vmax.f32 %v1988, 0.0
      %v2005 = vmax.f32 %v1989, 0.0
      %v2006 = vmax.f32 %v1990, 0.0
      %v2007 = vmax.f32 %v1991, 0.0
      %v2008 = vmax.f32 %v1992, 0.0
      %v2009 = vmax.f32 %v1993, 0.0
      %v2010 = vmin.f32 %v1994, 6.0
      %v2011 = vmin.f32 %v1995, 6.0
      %v2012 = vmin.f32 %v1996, 6.0
      %v2013 = vmin.f32 %v1997, 6.0
      %v2014 = vmin.f32 %v1998, 6.0
      %v2015 = vmin.f32 %v1999, 6.0
      %v2016 = vmin.f32 %v2000, 6.0
      %v2017 = vmin.f32 %v2001, 6.0
      %v2018 = vmin.f32 %v2002, 6.0
      %v2019 = vmin.f32 %v2003, 6.0
      %v2020 = vmin.f32 %v2004, 6.0
      %v2021 = vmin.f32 %v2005, 6.0
      %v2022 = vmin.f32 %v2006, 6.0
      %v2023 = vmin.f32 %v2007, 6.0
      %v2024 = vmin.f32 %v2008, 6.0
      %v2025 = vmin.f32 %v2009, 6.0
      %v2027 = vsel %vm279, %v2010, 0
      %v2030 = vsel %vm279, %v2011, 0
      %v2033 = vsel %vm279, %v2012, 0
      %v2036 = vsel %vm279, %v2013, 0
      %v2039 = vsel %vm279, %v2014, 0
      %v2042 = vsel %vm279, %v2015, 0
      %v2045 = vsel %vm279, %v2016, 0
      %v2048 = vsel %vm279, %v2017, 0
      %v2051 = vsel %vm279, %v2018, 0
      %v2054 = vsel %vm279, %v2019, 0
      %v2057 = vsel %vm279, %v2020, 0
      %v2060 = vsel %vm279, %v2021, 0
      %v2063 = vsel %vm279, %v2022, 0
      %v2066 = vsel %vm279, %v2023, 0
      %v2069 = vsel %vm279, %v2024, 0
      %v2072 = vsel %vm279, %v2025, 0
      %2074 = vmatprep.subr.mxu0 0.0
      %2075 = vmatpush1.msra.mxu0 0.0
      %2076 = vmatprep.subr.mxu0 0.0
      %2077 = vmatpush1.msra.mxu0 0.0
      %2078 = vmatprep.subr.mxu0 0.0
      %2079 = vmatpush1.msra.mxu0 0.0
      %2080 = vmatprep.subr.mxu0 0.0
      %2081 = vmatpush1.msra.mxu0 0.0
      %2082 = vmatprep.subr.mxu0 0.0
      %2083 = vmatpush1.msra.mxu0 0.0
      %2084 = vmatprep.subr.mxu0 0.0
      %2085 = vmatpush1.msra.mxu0 0.0
      %2086 = vmatprep.subr.mxu0 0.0
      %2087 = vmatpush1.msra.mxu0 0.0
      %2088 = vmatprep.subr.mxu0 0.0
      %2089 = vmatpush1.msra.mxu0 0.0
      %2090 = vmatprep.subr.mxu0 0.0
      %2091 = vmatpush1.msra.mxu0 0.0
      %2092 = vmatprep.subr.mxu0 0.0
      %2093 = vmatpush1.msra.mxu0 0.0
      %2094 = vmatprep.subr.mxu0 0.0
      %2095 = vmatpush1.msra.mxu0 0.0
      %2096 = vmatprep.subr.mxu0 0.0
      %2097 = vmatpush1.msra.mxu0 0.0
      %2098 = vmatprep.subr.mxu0 0.0
      %2099 = vmatpush1.msra.mxu0 0.0
      %2100 = vmatprep.subr.mxu0 0.0
      %2101 = vmatpush1.msra.mxu0 0.0
      %2102 = vmatprep.subr.mxu0 0.0
      %2103 = vmatpush1.msra.mxu0 %v788
      %2104 = vmatprep.subr.mxu0 0.0
      %2105 = vmatpush1.msra.mxu0 %v787
      %2106 = vmatprep.subr.mxu0 0.0
      %2107 = vmatpush2.msra.mxu0 0.0
      %2108 = vmatprep.subr.mxu0 0.0
      %2109 = vmatpush2.msra.mxu0 0.0
      %2110 = vmatprep.subr.mxu0 0.0
      %2111 = vmatpush2.msra.mxu0 0.0
      %2112 = vmatprep.subr.mxu0 0.0
      %2113 = vmatpush2.msra.mxu0 0.0
      %2114 = vmatprep.subr.mxu0 0.0
      %2115 = vmatpush2.msra.mxu0 0.0
      %2116 = vmatprep.subr.mxu0 0.0
      %2117 = vmatpush2.msra.mxu0 0.0
      %2118 = vmatprep.subr.mxu0 0.0
      %2119 = vmatpush2.msra.mxu0 0.0
      %2120 = vmatprep.subr.mxu0 0.0
      %2121 = vmatpush2.msra.mxu0 0.0
      %2122 = vmatprep.subr.mxu0 0.0
      %2123 = vmatpush2.msra.mxu0 0.0
      %2124 = vmatprep.subr.mxu0 0.0
      %2125 = vmatpush2.msra.mxu0 0.0
      %2126 = vmatprep.subr.mxu0 0.0
      %2127 = vmatpush2.msra.mxu0 0.0
      %2128 = vmatprep.subr.mxu0 0.0
      %2129 = vmatpush2.msra.mxu0 0.0
      %2130 = vmatprep.subr.mxu0 0.0
      %2131 = vmatpush2.msra.mxu0 0.0
      %2132 = vmatprep.subr.mxu0 0.0
      %2133 = vmatpush2.msra.mxu0 0.0
      %2134 = vmatprep.subr.mxu0 0.0
      %2135 = vmatpush2.msra.mxu0 0.0
      %2136 = vmatprep.subr.mxu0 0.0
      %2137 = vmatpush2.msra.mxu0 0.0
      %2138 = vmatprep.mubr.f32.mxu0 0.0
      %2139 = vmatmul.mubr.f32.gmra.mxu0 %v2027
      %v2140 = vpop.f32.mrf.mxu0
      %v2141 = vadd.f32 %v1308, %v2140
      %v2142 = vpop.f32.mrf.mxu0
      %2143 = vmatprep.mubr.f32.mxu0 0.0
      %2144 = vmatmul.mubr.f32.gmra.mxu0 %v2030
      %v2145 = vpop.f32.mrf.mxu0
      %v2146 = vadd.f32 %v1308, %v2145
      %v2147 = vpop.f32.mrf.mxu0
      %2148 = vmatprep.mubr.f32.mxu0 0.0
      %2149 = vmatmul.mubr.f32.gmra.mxu0 %v2033
      %v2150 = vpop.f32.mrf.mxu0
      %v2151 = vadd.f32 %v1308, %v2150
      %v2152 = vpop.f32.mrf.mxu0
      %2153 = vmatprep.mubr.f32.mxu0 0.0
      %2154 = vmatmul.mubr.f32.gmra.mxu0 %v2036
      %v2155 = vpop.f32.mrf.mxu0
      %v2156 = vadd.f32 %v1308, %v2155
      %v2157 = vpop.f32.mrf.mxu0
      %2158 = vmatprep.mubr.f32.mxu0 0.0
      %2159 = vmatmul.mubr.f32.gmra.mxu0 %v2039
      %v2160 = vpop.f32.mrf.mxu0
      %v2161 = vadd.f32 %v1308, %v2160
      %v2162 = vpop.f32.mrf.mxu0
      %2163 = vmatprep.mubr.f32.mxu0 0.0
      %2164 = vmatmul.mubr.f32.gmra.mxu0 %v2042
      %v2165 = vpop.f32.mrf.mxu0
      %v2166 = vadd.f32 %v1308, %v2165
      %v2167 = vpop.f32.mrf.mxu0
      %2168 = vmatprep.mubr.f32.mxu0 0.0
      %2169 = vmatmul.mubr.f32.gmra.mxu0 %v2045
      %v2170 = vpop.f32.mrf.mxu0
      %v2171 = vadd.f32 %v1308, %v2170
      %v2172 = vpop.f32.mrf.mxu0
      %2173 = vmatprep.mubr.f32.mxu0 0.0
      %2174 = vmatmul.mubr.f32.gmra.mxu0 %v2048
      %v2175 = vpop.f32.mrf.mxu0
      %v2176 = vadd.f32 %v1308, %v2175
      %v2177 = vpop.f32.mrf.mxu0
      %2178 = vmatprep.mubr.f32.mxu0 0.0
      %2179 = vmatmul.mubr.f32.gmra.mxu0 %v2051
      %v2180 = vpop.f32.mrf.mxu0
      %v2181 = vadd.f32 %v1308, %v2180
      %v2182 = vpop.f32.mrf.mxu0
      %2183 = vmatprep.mubr.f32.mxu0 0.0
      %2184 = vmatmul.mubr.f32.gmra.mxu0 %v2054
      %v2185 = vpop.f32.mrf.mxu0
      %v2186 = vadd.f32 %v1308, %v2185
      %v2187 = vpop.f32.mrf.mxu0
      %2188 = vmatprep.mubr.f32.mxu0 0.0
      %2189 = vmatmul.mubr.f32.gmra.mxu0 %v2057
      %v2190 = vpop.f32.mrf.mxu0
      %v2191 = vadd.f32 %v1308, %v2190
      %v2192 = vpop.f32.mrf.mxu0
      %2193 = vmatprep.mubr.f32.mxu0 0.0
      %2194 = vmatmul.mubr.f32.gmra.mxu0 %v2060
      %v2195 = vpop.f32.mrf.mxu0
      %v2196 = vadd.f32 %v1308, %v2195
      %v2197 = vpop.f32.mrf.mxu0
      %2198 = vmatprep.mubr.f32.mxu0 0.0
      %2199 = vmatmul.mubr.f32.gmra.mxu0 %v2063
      %v2200 = vpop.f32.mrf.mxu0
      %v2201 = vadd.f32 %v1308, %v2200
      %v2202 = vpop.f32.mrf.mxu0
      %2203 = vmatprep.mubr.f32.mxu0 0.0
      %2204 = vmatmul.mubr.f32.gmra.mxu0 %v2066
      %v2205 = vpop.f32.mrf.mxu0
      %v2206 = vadd.f32 %v1308, %v2205
      %v2207 = vpop.f32.mrf.mxu0
      %2208 = vmatprep.mubr.f32.mxu0 0.0
      %2209 = vmatmul.mubr.f32.gmra.mxu0 %v2069
      %v2210 = vpop.f32.mrf.mxu0
      %v2211 = vadd.f32 %v1308, %v2210
      %v2212 = vpop.f32.mrf.mxu0
      %2213 = vmatprep.mubr.f32.mxu0 0.0
      %2214 = vmatmul.mubr.f32.gmra.mxu0 %v2072
      %v2215 = vpop.f32.mrf.mxu0
      %v2216 = vadd.f32 %v1308, %v2215
      %v2217 = vpop.f32.mrf.mxu0
      %2218 = vdwg.mxu0
      %s2219 = smul.u32 8, 16
      %s2220 = scalar_lea.vmem %s273, %s2219
      %v2221 = vld [vmem:[%s2220] sm:$0xff]
      %v2222 = vld [vmem:[%s2220 + $0x8] sm:$0xff]
      %v2223 = vld [vmem:[%s2220 + $0x10] sm:$0xff]
      %v2224 = vld [vmem:[%s2220 + $0x18] sm:$0xff]
      %v2225 = vld [vmem:[%s2220 + $0x20] sm:$0xff]
      %v2226 = vld [vmem:[%s2220 + $0x28] sm:$0xff]
      %v2227 = vld [vmem:[%s2220 + $0x30] sm:$0xff]
      %v2228 = vld [vmem:[%s2220 + $0x38] sm:$0xff]
      %v2229 = vld [vmem:[%s2220 + $0x40] sm:$0xff]
      %v2230 = vld [vmem:[%s2220 + $0x48] sm:$0xff]
      %v2231 = vld [vmem:[%s2220 + $0x50] sm:$0xff]
      %v2232 = vld [vmem:[%s2220 + $0x58] sm:$0xff]
      %v2233 = vld [vmem:[%s2220 + $0x60] sm:$0xff]
      %v2234 = vld [vmem:[%s2220 + $0x68] sm:$0xff]
      %v2235 = vld [vmem:[%s2220 + $0x70] sm:$0xff]
      %v2236 = vld [vmem:[%s2220 + $0x78] sm:$0xff]
      %v2237 = vadd.f32 %v2141, %v2221
      %v2238 = vadd.f32 %v2146, %v2222
      %v2239 = vadd.f32 %v2151, %v2223
      %v2240 = vadd.f32 %v2156, %v2224
      %v2241 = vadd.f32 %v2161, %v2225
      %v2242 = vadd.f32 %v2166, %v2226
      %v2243 = vadd.f32 %v2171, %v2227
      %v2244 = vadd.f32 %v2176, %v2228
      %v2245 = vadd.f32 %v2181, %v2229
      %v2246 = vadd.f32 %v2186, %v2230
      %v2247 = vadd.f32 %v2191, %v2231
      %v2248 = vadd.f32 %v2196, %v2232
      %v2249 = vadd.f32 %v2201, %v2233
      %v2250 = vadd.f32 %v2206, %v2234
      %v2251 = vadd.f32 %v2211, %v2235
      %v2252 = vadd.f32 %v2216, %v2236
      %s2253 = scalar_lea.vmem %s278, %s2219
      %2254 = vst.msk [vmem:[%s2253] sm:$0xff] %vm362, %v2237
      %2255 = vst.msk [vmem:[%s2253 + $0x8] sm:$0xff] %vm362, %v2238
      %2256 = vst.msk [vmem:[%s2253 + $0x10] sm:$0xff] %vm362, %v2239
      %2257 = vst.msk [vmem:[%s2253 + $0x18] sm:$0xff] %vm362, %v2240
      %2258 = vst.msk [vmem:[%s2253 + $0x20] sm:$0xff] %vm362, %v2241
      %2259 = vst.msk [vmem:[%s2253 + $0x28] sm:$0xff] %vm362, %v2242
      %2260 = vst.msk [vmem:[%s2253 + $0x30] sm:$0xff] %vm362, %v2243
      %2261 = vst.msk [vmem:[%s2253 + $0x38] sm:$0xff] %vm362, %v2244
      %2262 = vst.msk [vmem:[%s2253 + $0x40] sm:$0xff] %vm362, %v2245
      %2263 = vst.msk [vmem:[%s2253 + $0x48] sm:$0xff] %vm362, %v2246
      %2264 = vst.msk [vmem:[%s2253 + $0x50] sm:$0xff] %vm362, %v2247
      %2265 = vst.msk [vmem:[%s2253 + $0x58] sm:$0xff] %vm362, %v2248
      %2266 = vst.msk [vmem:[%s2253 + $0x60] sm:$0xff] %vm362, %v2249
      %2267 = vst.msk [vmem:[%s2253 + $0x68] sm:$0xff] %vm362, %v2250
      %2268 = vst.msk [vmem:[%s2253 + $0x70] sm:$0xff] %vm362, %v2251
      %2269 = vst.msk [vmem:[%s2253 + $0x78] sm:$0xff] %vm362, %v2252
      %p2270 = scmp.lt.s32.totalorder %s18, 1
      %s2271 = scalar_select %p2270, %s18, 1
      %s2272 = smul.addr %s2271, 32
      %s2273 = smul.addr %s2272, 8
      %s2274 = scalar_lea.vmem %s7, %s2273
      // Predicated region
      $region49: #{tpu_custom_call.1} parent=47 // pred_check
        %p2275 = pneg %p188
      $region50: #{tpu_custom_call.1} parent=47 // pred_check_branch
        %2277 = sbr.rel (%p2275) target = $region52
      $region51: #{tpu_custom_call.1} parent=47 // pred_region
        _
      $region52: #{tpu_custom_call.1} parent=47 // pred_fallthru
        _
    $region48: #{tpu_custom_call.1} parent=5 // pred_fallthru
      _
    %p2278 = scmp.le.s32.totalorder 2, %s13
    // Predicated region
    $region53: #{tpu_custom_call.1} parent=5 // pred_check
      %p2279 = pneg %p2278
    $region54: #{tpu_custom_call.1} parent=5 // pred_check_branch
      %2281 = sbr.rel (%p2279) target = $region56
    $region55: #{tpu_custom_call.1} parent=5 // pred_region
      %s2282 = ssub.s32 %s13, 2
      // Predicated region
      $region57: #{tpu_custom_call.1} parent=55 // pred_check
        %p2283 = pneg %p194
      $region58: #{tpu_custom_call.1} parent=55 // pred_check_branch
        %2285 = sbr.rel (%p2283) target = $region60
      $region59: #{tpu_custom_call.1} parent=55 // pred_region
        %p2286 = scmp.lt.s32.totalorder %s19, 1
        %s2287 = scalar_select %p2286, %s19, 1
        %s2288 = smul.addr %s2287, 32
        %s2289 = smul.addr %s2288, 8
        %s2290 = scalar_lea.vmem %s7, %s2289
      $region60: #{tpu_custom_call.1} parent=55 // pred_fallthru
        _
    $region56: #{tpu_custom_call.1} parent=5 // pred_fallthru
      _
  $region6: #{tpu_custom_call.1} parent=0 // loop_footer
    %s17 = sadd.s32 1, %s13
  $region7: #{tpu_custom_call.1} parent=0 // loop_footer_branch
    %12 = sbr.rel target = $region3
  $region8: #{tpu_custom_call.1} parent=0 // loop_exit
    _

</llo_original>
